<compile_context>
chip_gen: v5e
topology: v5e:2x2
jax: 0.10.0
libtpu: 0.0.40
codegen_flags: <defaults>
</compile_context>

<pallas_src>
import functools

import jax
import jax.numpy as jnp
import numpy as np
from jax.experimental import pallas as pl
from jax.experimental.pallas import tpu as pltpu

# Geometry implied by the module (fc1 = Linear(out_2*4*4, 10) -> 16x16 input).
H1 = W1 = 16      # conv1 spatial size
H2 = W2 = 8       # after pool1
H3 = W3 = 4       # after pool2
C1 = 16           # out_1
C2 = 32           # out_2
KS = 5            # conv kernel size
PAD = 2           # conv padding
HP1 = H1 + 2 * PAD   # 20 vertically-padded conv1 input rows
NOUT = 10
NOUT_PAD = 128    # lane-dense logits block width


# ----------------------------------------------------------------------------
# In-kernel helpers
# ----------------------------------------------------------------------------
def _pool2x2(y, h_out, b, lanes):
    """2x2 max-pool of a (2*h_out*b, 2*lanes) slab.

    Rows are h*b + i (h-major, batch-minor); lanes are parity-split over w
    (even w in [0, lanes), odd w in [lanes, 2*lanes)), so:
      * column pool = max of the two lane halves      (1 aligned slice + 1 max)
      * row pool    = max of aligned sublane halves after a free regrouping
                      reshape                          (1 more max)
    Returns an (h_out*b, lanes) slab with rows ho*b + i, lanes wo*C + c.
    """
    t = jnp.maximum(y[:, :lanes], y[:, lanes:])            # (2*h_out*b, lanes)
    t = t.reshape(h_out, 2 * b, lanes)
    return jnp.maximum(t[:, :b, :], t[:, b:, :]).reshape(h_out * b, lanes)


def _cnn_fused_kernel(x_ref, w1k_ref, b1_ref, w2k_ref, b2_ref, wfk_ref, bf_ref,
                      o_ref, *, b):
    """One grid step = b images, fully VMEM/vreg resident.

    Layouts (rows are always h-major / batch-minor: row = h*b + image):
      x_ref : (20*b, 16)   vertically pre-padded input, lanes = w
      conv1 : (16*b, 256)  lanes = (w%2)*128 + (w//2)*C1 + c   (parity-split)
      p1    : ( 8*b, 128)  lanes = wo*C1 + c
      conv2 : ( 8*b, 256)  lanes = (w%2)*128 + (w//2)*C2 + c
      p2    : ( 4*b, 128)  lanes = wo*C2 + c
      out   : (   b, 128)  logits in lanes [0, 10), zeros elsewhere
    """
    f32 = jnp.float32

    # ---------------- conv1 + bias + ReLU : 5 banded-Toeplitz matmuls -------
    acc1 = jnp.zeros((H1 * b, W1 * C1), f32)
    for kh in range(KS):
        acc1 = acc1 + jnp.dot(x_ref[kh * b:(kh + H1) * b, :], w1k_ref[kh],
                              preferred_element_type=f32)
    y1 = jnp.maximum(acc1 + b1_ref[...], 0.0)                     # (16b, 256)

    # ---------------- pool1 (slab-level value ops only) ---------------------
    p1 = _pool2x2(y1, H2, b, W2 * C1)                             # (8b, 128)

    # ---------------- conv2 + bias + ReLU : 5 banded-Toeplitz matmuls -------
    zpad = jnp.zeros((PAD * b, W2 * C1), f32)
    xp2 = jnp.concatenate([zpad, p1, zpad], axis=0)               # (12b, 128)
    acc2 = jnp.zeros((H2 * b, W2 * C2), f32)
    for kh in range(KS):
        acc2 = acc2 + jnp.dot(xp2[kh * b:(kh + H2) * b, :], w2k_ref[kh],
                              preferred_element_type=f32)
    y2 = jnp.maximum(acc2 + b2_ref[...], 0.0)                     # (8b, 256)

    # ---------------- pool2 --------------------------------------------------
    p2 = _pool2x2(y2, H3, b, W3 * C2)                             # (4b, 128)

    # ---------------- fc (512 -> 10, padded to 128 lanes) -------------------
    acc = jnp.zeros((b, NOUT_PAD), f32)
    for ho in range(H3):
        acc = acc + jnp.dot(p2[ho * b:(ho + 1) * b, :], wfk_ref[ho],
                            preferred_element_type=f32)
    o_ref[...] = (acc + bf_ref[...]).astype(o_ref.dtype)          # (b, 128)


# ----------------------------------------------------------------------------
# One-time weight folding
#   * kw taps + horizontal padding  -> banded-Toeplitz lane matrices
#   * output lane order parity-split over w (makes pooling a half-slab max)
#   * torch NCHW flatten + fc1.weight.T folded; FC cols zero-padded to 128
# ----------------------------------------------------------------------------
def preprocess_params(params):
    w1, b1, w2, b2, wf, bf = params
    f32 = jnp.float32

    def parity_order(w):
        return np.concatenate([np.arange(0, w, 2), np.arange(1, w, 2)])

    def toeplitz(width):
        kw = np.arange(KS)[:, None, None]
        w_in = np.arange(width)[None, :, None]
        w_out = np.arange(width)[None, None, :]
        return jnp.asarray((w_in == w_out + kw - PAD).astype(np.float32))

    # conv1 (Cin=1): w1k[kh][w_in, lane_out(w,c)] = w1[c,0,kh,w_in-w+PAD] or 0
    w1t = jnp.transpose(w1[:, 0], (1, 2, 0)).astype(f32)           # (kh,kw,c)
    w1k = jnp.einsum('hkc,kiw->hiwc', w1t, toeplitz(W1))           # (5,16,16,16)
    w1k = w1k[:, :, parity_order(W1), :].reshape(KS, W1, W1 * C1)  # (5,16,256)
    b1t = jnp.tile(b1.astype(f32), W1).reshape(1, W1 * C1)

    # conv2: w2k[kh][w_in*C1+c1, lane_out(w,c2)] = w2[c2,c1,kh,w_in-w+PAD] or 0
    w2t = jnp.transpose(w2, (2, 3, 1, 0)).astype(f32)              # (kh,kw,c1,c2)
    w2k = jnp.einsum('hkio,kvw->hviwo', w2t, toeplitz(W2))         # (5,8,16,8,32)
    w2k = w2k[:, :, :, parity_order(W2), :].reshape(KS, W2 * C1, W2 * C2)
    b2t = jnp.tile(b2.astype(f32), W2).reshape(1, W2 * C2)

    # FC: fold torch's NCHW flatten + wf.T -> (H3, W3*C2, 128), zero-pad cols
    wfk = jnp.transpose(wf.reshape(NOUT, C2, H3, W3), (2, 3, 1, 0))  # (ho,wo,c2,10)
    wfk = wfk.reshape(H3, W3 * C2, NOUT).astype(f32)
    wfk = jnp.pad(wfk, ((0, 0), (0, 0), (0, NOUT_PAD - NOUT)))       # (4,128,128)
    bft = jnp.pad(bf.astype(f32), (0, NOUT_PAD - NOUT)).reshape(1, NOUT_PAD)
    return (w1k, b1t, w2k, b2t, wfk, bft)


# ----------------------------------------------------------------------------
# Wrapper: single pallas_call, B_TILE images per grid step
# ----------------------------------------------------------------------------
def cnn_forward(x_nchw, kparams, b_tile=8):
    """Fused CNN forward. b_tile (multiple of 8) images per grid step; the
    batch is zero-padded up to a multiple of b_tile.  For large batches on
    v7x, pick b_tile so the grid has >= 2 steps (both TensorCores get work)."""
    assert b_tile % 8 == 0, "b_tile must be a multiple of 8 (sublane alignment)"
    w1k, b1t, w2k, b2t, wfk, bft = kparams
    n = x_nchw.shape[0]
    g = max(1, -(-n // b_tile))
    n_pad = g * b_tile

    x = x_nchw.reshape(n, H1, W1).astype(jnp.float32)
    if n_pad != n:
        x = jnp.concatenate(
            [x, jnp.zeros((n_pad - n, H1, W1), jnp.float32)], axis=0)
    # HBM layout: rows = (group, padded_h, image-in-group), lanes = w.
    xk = x.reshape(g, b_tile, H1, W1).transpose(0, 2, 1, 3)        # (g,16,b,16)
    xk = jnp.pad(xk, ((0, 0), (PAD, PAD), (0, 0), (0, 0)))         # (g,20,b,16)
    xk = xk.reshape(g * HP1 * b_tile, W1)

    kernel = functools.partial(_cnn_fused_kernel, b=b_tile)
    out = pl.pallas_call(
        kernel,
        out_shape=jax.ShapeDtypeStruct((n_pad, NOUT_PAD), jnp.float32),
        grid_spec=pltpu.PrefetchScalarGridSpec(
            num_scalar_prefetch=0,
            grid=(g,),
            in_specs=[
                pl.BlockSpec((HP1 * b_tile, W1), lambda i: (i, 0)),          # x
                pl.BlockSpec((KS, W1, W1 * C1), lambda i: (0, 0, 0)),        # w1k
                pl.BlockSpec((1, W1 * C1), lambda i: (0, 0)),                # b1
                pl.BlockSpec((KS, W2 * C1, W2 * C2), lambda i: (0, 0, 0)),   # w2k
                pl.BlockSpec((1, W2 * C2), lambda i: (0, 0)),                # b2
                pl.BlockSpec((H3, W3 * C2, NOUT_PAD), lambda i: (0, 0, 0)),  # wfk
                pl.BlockSpec((1, NOUT_PAD), lambda i: (0, 0)),               # bf
            ],
            out_specs=pl.BlockSpec((b_tile, NOUT_PAD), lambda i: (i, 0)),
        ),
        compiler_params=pltpu.CompilerParams(
            dimension_semantics=("parallel",),       # shard batch groups on v7x
        ),
    )(xk, w1k, b1t, w2k, b2t, wfk, bft)
    return out[:n, :NOUT]


# ----------------------------------------------------------------------------
# Pure-JAX reference (exact-f32) for the numerical check
# ----------------------------------------------------------------------------
def reference_forward(x_nchw, params):
    w1, b1, w2, b2, wf, bf = params
    hi = jax.lax.Precision.HIGHEST

    def conv(x, w, b):
        y = jax.lax.conv_general_dilated(
            x, w, (1, 1), ((PAD, PAD), (PAD, PAD)),
            dimension_numbers=("NCHW", "OIHW", "NCHW"), precision=hi)
        return jnp.maximum(y + b[None, :, None, None], 0.0)

    def pool(x):
        n, c, h, w = x.shape
        return x.reshape(n, c, h // 2, 2, w // 2, 2).max(axis=(3, 5))

    y = pool(conv(x_nchw, w1, b1))
    y = pool(conv(y, w2, b2))
    y = y.reshape(x_nchw.shape[0], -1)
    return jnp.dot(y, wf.T, precision=hi) + bf


# ----------------------------------------------------------------------------
# Deterministic parameter init (PyTorch-shaped, uniform(-1/sqrt(fan_in), +))
# ----------------------------------------------------------------------------
def init_params(key, out_1=C1, out_2=C2):
    ks = jax.random.split(key, 6)

    def uni(k, shape, fan_in):
        bound = 1.0 / np.sqrt(fan_in)
        return jax.random.uniform(k, shape, jnp.float32, -bound, bound)

    w1 = uni(ks[0], (out_1, 1, KS, KS), 1 * KS * KS)
    b1 = uni(ks[1], (out_1,), 1 * KS * KS)
    w2 = uni(ks[2], (out_2, out_1, KS, KS), out_1 * KS * KS)
    b2 = uni(ks[3], (out_2,), out_1 * KS * KS)
    wf = uni(ks[4], (NOUT, out_2 * H3 * W3), out_2 * H3 * W3)
    bf = uni(ks[5], (NOUT,), out_2 * H3 * W3)
    return (w1, b1, w2, b2, wf, bf)


if __name__ == "__main__":
    key = jax.random.PRNGKey(0)
    k_x, k_p = jax.random.split(key)

    x = jax.random.normal(k_x, (2, 1, 16, 16), dtype=jnp.float32)
    params = init_params(k_p)
    kparams = preprocess_params(params)          # one-time weight folding

    fwd = jax.jit(functools.partial(cnn_forward, b_tile=8))
    out = jax.block_until_ready(fwd(x, kparams))
    assert out.shape == (2, NOUT), out.shape

    ref = jax.block_until_ready(reference_forward(x, params))
    np.testing.assert_allclose(np.asarray(out), np.asarray(ref),
                               rtol=2e-3, atol=2e-3)

    print("KERNEL_OK")
</pallas_src>

<mosaic_0001>
module attributes {stable_mosaic.version = 11 : i64} {
  func.func @_cnn_fused_kernel(%arg0: i32, %arg1: memref<160x16xf32, #tpu.memory_space<vmem>>, %arg2: memref<5x16x256xf32, #tpu.memory_space<vmem>>, %arg3: memref<1x256xf32, #tpu.memory_space<vmem>>, %arg4: memref<5x128x256xf32, #tpu.memory_space<vmem>>, %arg5: memref<1x256xf32, #tpu.memory_space<vmem>>, %arg6: memref<4x128x128xf32, #tpu.memory_space<vmem>>, %arg7: memref<1x128xf32, #tpu.memory_space<vmem>>, %arg8: memref<8x128xf32, #tpu.memory_space<vmem>>) attributes {dimension_semantics = [#tpu.dimension_semantics<parallel>], iteration_bounds = array<i64: 1>, scalar_prefetch = 0 : i64, scratch_operands = 0 : i64, tpu.core_type = #tpu.core_type<tc>, window_params = [{transform_indices = @transform_0, window_bounds = array<i64: 160, 16>}, {pipeline_mode = #tpu.pipeline_mode<synchronous>, transform_indices = @transform_1, window_bounds = array<i64: 5, 16, 256>}, {pipeline_mode = #tpu.pipeline_mode<synchronous>, transform_indices = @transform_2, window_bounds = array<i64: 1, 256>}, {pipeline_mode = #tpu.pipeline_mode<synchronous>, transform_indices = @transform_3, window_bounds = array<i64: 5, 128, 256>}, {pipeline_mode = #tpu.pipeline_mode<synchronous>, transform_indices = @transform_4, window_bounds = array<i64: 1, 256>}, {pipeline_mode = #tpu.pipeline_mode<synchronous>, transform_indices = @transform_5, window_bounds = array<i64: 4, 128, 128>}, {pipeline_mode = #tpu.pipeline_mode<synchronous>, transform_indices = @transform_6, window_bounds = array<i64: 1, 128>}, {transform_indices = @transform_7, window_bounds = array<i64: 8, 128>}]} {
    %cst = arith.constant 0.000000e+00 : f32
    %0 = vector.broadcast %cst : f32 to vector<128x256xf32>
    %c0 = arith.constant 0 : index
    %c0_0 = arith.constant 0 : index
    %1 = vector.load %arg1[%c0, %c0_0] : memref<160x16xf32, #tpu.memory_space<vmem>>, vector<128x16xf32>
    %c0_1 = arith.constant 0 : index
    %c0_2 = arith.constant 0 : index
    %c0_3 = arith.constant 0 : index
    %2 = vector.load %arg2[%c0_1, %c0_2, %c0_3] : memref<5x16x256xf32, #tpu.memory_space<vmem>>, vector<1x16x256xf32>
    %3 = vector.shape_cast %2 : vector<1x16x256xf32> to vector<16x256xf32>
    %cst_4 = arith.constant dense<0.000000e+00> : vector<128x256xf32>
    %4 = tpu.matmul %1, %3, %cst_4 {dimension_numbers = #tpu.dot_dimension_numbers<[1], [0], [0], [1], [0, 0, 1, 1], [], []>} : vector<128x16xf32>, vector<16x256xf32>, vector<128x256xf32> -> vector<128x256xf32>
    %5 = arith.addf %0, %4 : vector<128x256xf32>
    %c8 = arith.constant 8 : index
    %c0_5 = arith.constant 0 : index
    %6 = vector.load %arg1[%c8, %c0_5] : memref<160x16xf32, #tpu.memory_space<vmem>>, vector<128x16xf32>
    %c1 = arith.constant 1 : index
    %c0_6 = arith.constant 0 : index
    %c0_7 = arith.constant 0 : index
    %7 = vector.load %arg2[%c1, %c0_6, %c0_7] : memref<5x16x256xf32, #tpu.memory_space<vmem>>, vector<1x16x256xf32>
    %8 = vector.shape_cast %7 : vector<1x16x256xf32> to vector<16x256xf32>
    %cst_8 = arith.constant dense<0.000000e+00> : vector<128x256xf32>
    %9 = tpu.matmul %6, %8, %cst_8 {dimension_numbers = #tpu.dot_dimension_numbers<[1], [0], [0], [1], [0, 0, 1, 1], [], []>} : vector<128x16xf32>, vector<16x256xf32>, vector<128x256xf32> -> vector<128x256xf32>
    %10 = arith.addf %5, %9 : vector<128x256xf32>
    %c16 = arith.constant 16 : index
    %c0_9 = arith.constant 0 : index
    %11 = vector.load %arg1[%c16, %c0_9] : memref<160x16xf32, #tpu.memory_space<vmem>>, vector<128x16xf32>
    %c2 = arith.constant 2 : index
    %c0_10 = arith.constant 0 : index
    %c0_11 = arith.constant 0 : index
    %12 = vector.load %arg2[%c2, %c0_10, %c0_11] : memref<5x16x256xf32, #tpu.memory_space<vmem>>, vector<1x16x256xf32>
    %13 = vector.shape_cast %12 : vector<1x16x256xf32> to vector<16x256xf32>
    %cst_12 = arith.constant dense<0.000000e+00> : vector<128x256xf32>
    %14 = tpu.matmul %11, %13, %cst_12 {dimension_numbers = #tpu.dot_dimension_numbers<[1], [0], [0], [1], [0, 0, 1, 1], [], []>} : vector<128x16xf32>, vector<16x256xf32>, vector<128x256xf32> -> vector<128x256xf32>
    %15 = arith.addf %10, %14 : vector<128x256xf32>
    %c24 = arith.constant 24 : index
    %c0_13 = arith.constant 0 : index
    %16 = vector.load %arg1[%c24, %c0_13] : memref<160x16xf32, #tpu.memory_space<vmem>>, vector<128x16xf32>
    %c3 = arith.constant 3 : index
    %c0_14 = arith.constant 0 : index
    %c0_15 = arith.constant 0 : index
    %17 = vector.load %arg2[%c3, %c0_14, %c0_15] : memref<5x16x256xf32, #tpu.memory_space<vmem>>, vector<1x16x256xf32>
    %18 = vector.shape_cast %17 : vector<1x16x256xf32> to vector<16x256xf32>
    %cst_16 = arith.constant dense<0.000000e+00> : vector<128x256xf32>
    %19 = tpu.matmul %16, %18, %cst_16 {dimension_numbers = #tpu.dot_dimension_numbers<[1], [0], [0], [1], [0, 0, 1, 1], [], []>} : vector<128x16xf32>, vector<16x256xf32>, vector<128x256xf32> -> vector<128x256xf32>
    %20 = arith.addf %15, %19 : vector<128x256xf32>
    %c32 = arith.constant 32 : index
    %c0_17 = arith.constant 0 : index
    %21 = vector.load %arg1[%c32, %c0_17] : memref<160x16xf32, #tpu.memory_space<vmem>>, vector<128x16xf32>
    %c4 = arith.constant 4 : index
    %c0_18 = arith.constant 0 : index
    %c0_19 = arith.constant 0 : index
    %22 = vector.load %arg2[%c4, %c0_18, %c0_19] : memref<5x16x256xf32, #tpu.memory_space<vmem>>, vector<1x16x256xf32>
    %23 = vector.shape_cast %22 : vector<1x16x256xf32> to vector<16x256xf32>
    %cst_20 = arith.constant dense<0.000000e+00> : vector<128x256xf32>
    %24 = tpu.matmul %21, %23, %cst_20 {dimension_numbers = #tpu.dot_dimension_numbers<[1], [0], [0], [1], [0, 0, 1, 1], [], []>} : vector<128x16xf32>, vector<16x256xf32>, vector<128x256xf32> -> vector<128x256xf32>
    %25 = arith.addf %20, %24 : vector<128x256xf32>
    %c0_21 = arith.constant 0 : index
    %c0_22 = arith.constant 0 : index
    %26 = vector.load %arg3[%c0_21, %c0_22] : memref<1x256xf32, #tpu.memory_space<vmem>>, vector<1x256xf32>
    %27 = vector.broadcast %26 : vector<1x256xf32> to vector<128x256xf32>
    %28 = arith.addf %25, %27 : vector<128x256xf32>
    %cst_23 = arith.constant 0.000000e+00 : f32
    %29 = vector.broadcast %cst_23 : f32 to vector<128x256xf32>
    %30 = arith.maximumf %28, %29 : vector<128x256xf32>
    %31 = vector.extract_strided_slice %30 {offsets = [0, 0], sizes = [128, 128], strides = [1, 1]} : vector<128x256xf32> to vector<128x128xf32>
    %32 = vector.extract_strided_slice %30 {offsets = [0, 128], sizes = [128, 128], strides = [1, 1]} : vector<128x256xf32> to vector<128x128xf32>
    %33 = arith.maximumf %31, %32 : vector<128x128xf32>
    %34 = vector.shape_cast %33 : vector<128x128xf32> to vector<8x16x128xf32>
    %35 = vector.extract_strided_slice %34 {offsets = [0, 0, 0], sizes = [8, 8, 128], strides = [1, 1, 1]} : vector<8x16x128xf32> to vector<8x8x128xf32>
    %36 = vector.extract_strided_slice %34 {offsets = [0, 8, 0], sizes = [8, 8, 128], strides = [1, 1, 1]} : vector<8x16x128xf32> to vector<8x8x128xf32>
    %37 = arith.maximumf %35, %36 : vector<8x8x128xf32>
    %38 = vector.shape_cast %37 : vector<8x8x128xf32> to vector<64x128xf32>
    %cst_24 = arith.constant 0.000000e+00 : f32
    %39 = vector.broadcast %cst_24 : f32 to vector<16x128xf32>
    %40 = tpu.concatenate %39, %38, %39 in 0 : vector<16x128xf32>, vector<64x128xf32>, vector<16x128xf32> -> vector<96x128xf32>
    %cst_25 = arith.constant 0.000000e+00 : f32
    %41 = vector.broadcast %cst_25 : f32 to vector<64x256xf32>
    %42 = vector.extract_strided_slice %40 {offsets = [0, 0], sizes = [64, 128], strides = [1, 1]} : vector<96x128xf32> to vector<64x128xf32>
    %c0_26 = arith.constant 0 : index
    %c0_27 = arith.constant 0 : index
    %c0_28 = arith.constant 0 : index
    %43 = vector.load %arg4[%c0_26, %c0_27, %c0_28] : memref<5x128x256xf32, #tpu.memory_space<vmem>>, vector<1x128x256xf32>
    %44 = vector.shape_cast %43 : vector<1x128x256xf32> to vector<128x256xf32>
    %cst_29 = arith.constant dense<0.000000e+00> : vector<64x256xf32>
    %45 = tpu.matmul %42, %44, %cst_29 {dimension_numbers = #tpu.dot_dimension_numbers<[1], [0], [0], [1], [0, 0, 1, 1], [], []>} : vector<64x128xf32>, vector<128x256xf32>, vector<64x256xf32> -> vector<64x256xf32>
    %46 = arith.addf %41, %45 : vector<64x256xf32>
    %47 = vector.extract_strided_slice %40 {offsets = [8, 0], sizes = [64, 128], strides = [1, 1]} : vector<96x128xf32> to vector<64x128xf32>
    %c1_30 = arith.constant 1 : index
    %c0_31 = arith.constant 0 : index
    %c0_32 = arith.constant 0 : index
    %48 = vector.load %arg4[%c1_30, %c0_31, %c0_32] : memref<5x128x256xf32, #tpu.memory_space<vmem>>, vector<1x128x256xf32>
    %49 = vector.shape_cast %48 : vector<1x128x256xf32> to vector<128x256xf32>
    %cst_33 = arith.constant dense<0.000000e+00> : vector<64x256xf32>
    %50 = tpu.matmul %47, %49, %cst_33 {dimension_numbers = #tpu.dot_dimension_numbers<[1], [0], [0], [1], [0, 0, 1, 1], [], []>} : vector<64x128xf32>, vector<128x256xf32>, vector<64x256xf32> -> vector<64x256xf32>
    %51 = arith.addf %46, %50 : vector<64x256xf32>
    %52 = vector.extract_strided_slice %40 {offsets = [16, 0], sizes = [64, 128], strides = [1, 1]} : vector<96x128xf32> to vector<64x128xf32>
    %c2_34 = arith.constant 2 : index
    %c0_35 = arith.constant 0 : index
    %c0_36 = arith.constant 0 : index
    %53 = vector.load %arg4[%c2_34, %c0_35, %c0_36] : memref<5x128x256xf32, #tpu.memory_space<vmem>>, vector<1x128x256xf32>
    %54 = vector.shape_cast %53 : vector<1x128x256xf32> to vector<128x256xf32>
    %cst_37 = arith.constant dense<0.000000e+00> : vector<64x256xf32>
    %55 = tpu.matmul %52, %54, %cst_37 {dimension_numbers = #tpu.dot_dimension_numbers<[1], [0], [0], [1], [0, 0, 1, 1], [], []>} : vector<64x128xf32>, vector<128x256xf32>, vector<64x256xf32> -> vector<64x256xf32>
    %56 = arith.addf %51, %55 : vector<64x256xf32>
    %57 = vector.extract_strided_slice %40 {offsets = [24, 0], sizes = [64, 128], strides = [1, 1]} : vector<96x128xf32> to vector<64x128xf32>
    %c3_38 = arith.constant 3 : index
    %c0_39 = arith.constant 0 : index
    %c0_40 = arith.constant 0 : index
    %58 = vector.load %arg4[%c3_38, %c0_39, %c0_40] : memref<5x128x256xf32, #tpu.memory_space<vmem>>, vector<1x128x256xf32>
    %59 = vector.shape_cast %58 : vector<1x128x256xf32> to vector<128x256xf32>
    %cst_41 = arith.constant dense<0.000000e+00> : vector<64x256xf32>
    %60 = tpu.matmul %57, %59, %cst_41 {dimension_numbers = #tpu.dot_dimension_numbers<[1], [0], [0], [1], [0, 0, 1, 1], [], []>} : vector<64x128xf32>, vector<128x256xf32>, vector<64x256xf32> -> vector<64x256xf32>
    %61 = arith.addf %56, %60 : vector<64x256xf32>
    %62 = vector.extract_strided_slice %40 {offsets = [32, 0], sizes = [64, 128], strides = [1, 1]} : vector<96x128xf32> to vector<64x128xf32>
    %c4_42 = arith.constant 4 : index
    %c0_43 = arith.constant 0 : index
    %c0_44 = arith.constant 0 : index
    %63 = vector.load %arg4[%c4_42, %c0_43, %c0_44] : memref<5x128x256xf32, #tpu.memory_space<vmem>>, vector<1x128x256xf32>
    %64 = vector.shape_cast %63 : vector<1x128x256xf32> to vector<128x256xf32>
    %cst_45 = arith.constant dense<0.000000e+00> : vector<64x256xf32>
    %65 = tpu.matmul %62, %64, %cst_45 {dimension_numbers = #tpu.dot_dimension_numbers<[1], [0], [0], [1], [0, 0, 1, 1], [], []>} : vector<64x128xf32>, vector<128x256xf32>, vector<64x256xf32> -> vector<64x256xf32>
    %66 = arith.addf %61, %65 : vector<64x256xf32>
    %c0_46 = arith.constant 0 : index
    %c0_47 = arith.constant 0 : index
    %67 = vector.load %arg5[%c0_46, %c0_47] : memref<1x256xf32, #tpu.memory_space<vmem>>, vector<1x256xf32>
    %68 = vector.broadcast %67 : vector<1x256xf32> to vector<64x256xf32>
    %69 = arith.addf %66, %68 : vector<64x256xf32>
    %cst_48 = arith.constant 0.000000e+00 : f32
    %70 = vector.broadcast %cst_48 : f32 to vector<64x256xf32>
    %71 = arith.maximumf %69, %70 : vector<64x256xf32>
    %72 = vector.extract_strided_slice %71 {offsets = [0, 0], sizes = [64, 128], strides = [1, 1]} : vector<64x256xf32> to vector<64x128xf32>
    %73 = vector.extract_strided_slice %71 {offsets = [0, 128], sizes = [64, 128], strides = [1, 1]} : vector<64x256xf32> to vector<64x128xf32>
    %74 = arith.maximumf %72, %73 : vector<64x128xf32>
    %75 = vector.shape_cast %74 : vector<64x128xf32> to vector<4x16x128xf32>
    %76 = vector.extract_strided_slice %75 {offsets = [0, 0, 0], sizes = [4, 8, 128], strides = [1, 1, 1]} : vector<4x16x128xf32> to vector<4x8x128xf32>
    %77 = vector.extract_strided_slice %75 {offsets = [0, 8, 0], sizes = [4, 8, 128], strides = [1, 1, 1]} : vector<4x16x128xf32> to vector<4x8x128xf32>
    %78 = arith.maximumf %76, %77 : vector<4x8x128xf32>
    %79 = vector.shape_cast %78 : vector<4x8x128xf32> to vector<32x128xf32>
    %cst_49 = arith.constant 0.000000e+00 : f32
    %80 = vector.broadcast %cst_49 : f32 to vector<8x128xf32>
    %81 = vector.extract_strided_slice %79 {offsets = [0, 0], sizes = [8, 128], strides = [1, 1]} : vector<32x128xf32> to vector<8x128xf32>
    %c0_50 = arith.constant 0 : index
    %c0_51 = arith.constant 0 : index
    %c0_52 = arith.constant 0 : index
    %82 = vector.load %arg6[%c0_50, %c0_51, %c0_52] : memref<4x128x128xf32, #tpu.memory_space<vmem>>, vector<1x128x128xf32>
    %83 = vector.shape_cast %82 : vector<1x128x128xf32> to vector<128x128xf32>
    %cst_53 = arith.constant dense<0.000000e+00> : vector<8x128xf32>
    %84 = tpu.matmul %81, %83, %cst_53 {dimension_numbers = #tpu.dot_dimension_numbers<[1], [0], [0], [1], [0, 0, 1, 1], [], []>} : vector<8x128xf32>, vector<128x128xf32>, vector<8x128xf32> -> vector<8x128xf32>
    %85 = arith.addf %80, %84 : vector<8x128xf32>
    %86 = vector.extract_strided_slice %79 {offsets = [8, 0], sizes = [8, 128], strides = [1, 1]} : vector<32x128xf32> to vector<8x128xf32>
    %c1_54 = arith.constant 1 : index
    %c0_55 = arith.constant 0 : index
    %c0_56 = arith.constant 0 : index
    %87 = vector.load %arg6[%c1_54, %c0_55, %c0_56] : memref<4x128x128xf32, #tpu.memory_space<vmem>>, vector<1x128x128xf32>
    %88 = vector.shape_cast %87 : vector<1x128x128xf32> to vector<128x128xf32>
    %cst_57 = arith.constant dense<0.000000e+00> : vector<8x128xf32>
    %89 = tpu.matmul %86, %88, %cst_57 {dimension_numbers = #tpu.dot_dimension_numbers<[1], [0], [0], [1], [0, 0, 1, 1], [], []>} : vector<8x128xf32>, vector<128x128xf32>, vector<8x128xf32> -> vector<8x128xf32>
    %90 = arith.addf %85, %89 : vector<8x128xf32>
    %91 = vector.extract_strided_slice %79 {offsets = [16, 0], sizes = [8, 128], strides = [1, 1]} : vector<32x128xf32> to vector<8x128xf32>
    %c2_58 = arith.constant 2 : index
    %c0_59 = arith.constant 0 : index
    %c0_60 = arith.constant 0 : index
    %92 = vector.load %arg6[%c2_58, %c0_59, %c0_60] : memref<4x128x128xf32, #tpu.memory_space<vmem>>, vector<1x128x128xf32>
    %93 = vector.shape_cast %92 : vector<1x128x128xf32> to vector<128x128xf32>
    %cst_61 = arith.constant dense<0.000000e+00> : vector<8x128xf32>
    %94 = tpu.matmul %91, %93, %cst_61 {dimension_numbers = #tpu.dot_dimension_numbers<[1], [0], [0], [1], [0, 0, 1, 1], [], []>} : vector<8x128xf32>, vector<128x128xf32>, vector<8x128xf32> -> vector<8x128xf32>
    %95 = arith.addf %90, %94 : vector<8x128xf32>
    %96 = vector.extract_strided_slice %79 {offsets = [24, 0], sizes = [8, 128], strides = [1, 1]} : vector<32x128xf32> to vector<8x128xf32>
    %c3_62 = arith.constant 3 : index
    %c0_63 = arith.constant 0 : index
    %c0_64 = arith.constant 0 : index
    %97 = vector.load %arg6[%c3_62, %c0_63, %c0_64] : memref<4x128x128xf32, #tpu.memory_space<vmem>>, vector<1x128x128xf32>
    %98 = vector.shape_cast %97 : vector<1x128x128xf32> to vector<128x128xf32>
    %cst_65 = arith.constant dense<0.000000e+00> : vector<8x128xf32>
    %99 = tpu.matmul %96, %98, %cst_65 {dimension_numbers = #tpu.dot_dimension_numbers<[1], [0], [0], [1], [0, 0, 1, 1], [], []>} : vector<8x128xf32>, vector<128x128xf32>, vector<8x128xf32> -> vector<8x128xf32>
    %100 = arith.addf %95, %99 : vector<8x128xf32>
    %c0_66 = arith.constant 0 : index
    %c0_67 = arith.constant 0 : index
    %101 = vector.load %arg7[%c0_66, %c0_67] : memref<1x128xf32, #tpu.memory_space<vmem>>, vector<1x128xf32>
    %102 = vector.broadcast %101 : vector<1x128xf32> to vector<8x128xf32>
    %103 = arith.addf %100, %102 : vector<8x128xf32>
    %c0_68 = arith.constant 0 : index
    %c0_69 = arith.constant 0 : index
    %104 = vector.load %arg8[%c0_68, %c0_69] : memref<8x128xf32, #tpu.memory_space<vmem>>, vector<8x128xf32>
    tpu.vector_store %arg8[%c0_68, %c0_69], %103 {strides = array<i32>} : memref<8x128xf32, #tpu.memory_space<vmem>>, vector<8x128xf32>,
    return
  }
  func.func @transform_0(%arg0: i32) -> (i32, i32) {
    %c0_i32 = arith.constant 0 : i32
    %c0_i32_0 = arith.constant 0 : i32
    return %arg0, %c0_i32 : i32, i32
  }
  func.func @transform_1(%arg0: i32) -> (i32, i32, i32) {
    %c0_i32 = arith.constant 0 : i32
    %c0_i32_0 = arith.constant 0 : i32
    %c0_i32_1 = arith.constant 0 : i32
    %c0_i32_2 = arith.constant 0 : i32
    return %c0_i32, %c0_i32_0, %c0_i32_1 : i32, i32, i32
  }
  func.func @transform_2(%arg0: i32) -> (i32, i32) {
    %c0_i32 = arith.constant 0 : i32
    %c0_i32_0 = arith.constant 0 : i32
    %c0_i32_1 = arith.constant 0 : i32
    return %c0_i32, %c0_i32_0 : i32, i32
  }
  func.func @transform_3(%arg0: i32) -> (i32, i32, i32) {
    %c0_i32 = arith.constant 0 : i32
    %c0_i32_0 = arith.constant 0 : i32
    %c0_i32_1 = arith.constant 0 : i32
    %c0_i32_2 = arith.constant 0 : i32
    return %c0_i32, %c0_i32_0, %c0_i32_1 : i32, i32, i32
  }
  func.func @transform_4(%arg0: i32) -> (i32, i32) {
    %c0_i32 = arith.constant 0 : i32
    %c0_i32_0 = arith.constant 0 : i32
    %c0_i32_1 = arith.constant 0 : i32
    return %c0_i32, %c0_i32_0 : i32, i32
  }
  func.func @transform_5(%arg0: i32) -> (i32, i32, i32) {
    %c0_i32 = arith.constant 0 : i32
    %c0_i32_0 = arith.constant 0 : i32
    %c0_i32_1 = arith.constant 0 : i32
    %c0_i32_2 = arith.constant 0 : i32
    return %c0_i32, %c0_i32_0, %c0_i32_1 : i32, i32, i32
  }
  func.func @transform_6(%arg0: i32) -> (i32, i32) {
    %c0_i32 = arith.constant 0 : i32
    %c0_i32_0 = arith.constant 0 : i32
    %c0_i32_1 = arith.constant 0 : i32
    return %c0_i32, %c0_i32_0 : i32, i32
  }
  func.func @transform_7(%arg0: i32) -> (i32, i32) {
    %c0_i32 = arith.constant 0 : i32
    %c0_i32_0 = arith.constant 0 : i32
    return %arg0, %c0_i32 : i32, i32
  }
}

</mosaic_0001>

<llo_original>
// kernel: cnn_forward.1
$region0: #{cnn_forward.1}
  #allocation0 [shape = 'u32[]', space=smem, size = 0x4, offset = 0x4, fixed_abs, tag = 'smem constant byte address 0x4 - core index']
  #allocation1 [shape = 'u32[72,128]{1,0:T(1,128)}', space=vmem, size = 0x9000, scoped, tag = 'internal scratch']
  %s0 = inlined_call_operand.vmem [shape: f32[160,16], index: 0, kind: input, shape index: {}]
  %s1 = inlined_call_operand.vmem [shape: f32[5,16,256], index: 1, kind: input, shape index: {}]
  %s2 = inlined_call_operand.vmem [shape: f32[1,256], index: 2, kind: input, shape index: {}]
  %s3 = inlined_call_operand.hbm [shape: f32[5,128,256], index: 3, kind: input, shape index: {}]
  %s4 = inlined_call_operand.vmem [shape: f32[1,256], index: 4, kind: input, shape index: {}]
  %s5 = inlined_call_operand.vmem [shape: f32[4,128,128], index: 5, kind: input, shape index: {}]
  %s6 = inlined_call_operand.vmem [shape: f32[1,128], index: 6, kind: input, shape index: {}]
  %s7 = inlined_call_operand.vmem [shape: f32[8,128], index: 7, kind: output, shape index: {}]
  %s8 = sld [smem:[#allocation0]]
  $region42: #{cnn_forward.1} parent=0
    _
  %s10 = ssub.s32 1, %s8
  %s11 = scalar_select 0, %s10, %s8
  $region1: #{cnn_forward.1} parent=0
    #allocation2 [shape = 'u8[655360]{0}', space=vmem, size = 0xa0000, scoped, tag = 'input window, operand 3, single buffered']
    #allocation3 [shape = 's32[1]{0}', space=sflag, size = 0x4, scoped, tag = 'scoped memory for cnn_forward.1']
    %12 = vsyncpa [#allocation3], 0
    // Predicated region
    $region2: #{cnn_forward.1} parent=1 // pred_check
      _
    $region3: #{cnn_forward.1} parent=1 // pred_check_branch
      %14 = sbr.rel (0) target = $region5
    $region4: #{cnn_forward.1} parent=1 // pred_region
      _
    $region5: #{cnn_forward.1} parent=1 // pred_fallthru
      _
    // Predicated region
    $region6: #{cnn_forward.1} parent=1 // pred_check
      _
    $region7: #{cnn_forward.1} parent=1 // pred_check_branch
      %16 = sbr.rel (0) target = $region9
    $region8: #{cnn_forward.1} parent=1 // pred_region
      _
    $region9: #{cnn_forward.1} parent=1 // pred_fallthru
      _
    // Predicated region
    $region10: #{cnn_forward.1} parent=1 // pred_check
      _
    $region11: #{cnn_forward.1} parent=1 // pred_check_branch
      %18 = sbr.rel (0) target = $region13
    $region12: #{cnn_forward.1} parent=1 // pred_region
      _
    $region13: #{cnn_forward.1} parent=1 // pred_fallthru
      _
    // Predicated region
    $region14: #{cnn_forward.1} parent=1 // pred_check
      _
    $region15: #{cnn_forward.1} parent=1 // pred_check_branch
      %20 = sbr.rel (0) target = $region17
    $region16: #{cnn_forward.1} parent=1 // pred_region
      %22 = vsyncadd [#allocation3], 0
      %s23 = sshll.u32 %s3, 4
      %s24 = int_to_ptr.hbm [resolvable:$true] %s23
      %s25 = sshll.u32 [#allocation2], 4
      %s26 = int_to_ptr.vmem [resolvable:$true] %s25
      %31 = dma.hbm_to_vmem [thread:$0]  %s24, 20480, %s26, [#allocation3], 256, 256, 16
    $region17: #{cnn_forward.1} parent=1 // pred_fallthru
      _
    // Predicated region
    $region18: #{cnn_forward.1} parent=1 // pred_check
      _
    $region19: #{cnn_forward.1} parent=1 // pred_check_branch
      %33 = sbr.rel (0) target = $region21
    $region20: #{cnn_forward.1} parent=1 // pred_region
      _
    $region21: #{cnn_forward.1} parent=1 // pred_fallthru
      _
    // Predicated region
    $region22: #{cnn_forward.1} parent=1 // pred_check
      _
    $region23: #{cnn_forward.1} parent=1 // pred_check_branch
      %35 = sbr.rel (0) target = $region25
    $region24: #{cnn_forward.1} parent=1 // pred_region
      _
    $region25: #{cnn_forward.1} parent=1 // pred_fallthru
      _
    // Predicated region
    $region26: #{cnn_forward.1} parent=1 // pred_check
      _
    $region27: #{cnn_forward.1} parent=1 // pred_check_branch
      %37 = sbr.rel (0) target = $region29
    $region28: #{cnn_forward.1} parent=1 // pred_region
      _
    $region29: #{cnn_forward.1} parent=1 // pred_fallthru
      _
    // Predicated region
    $region30: #{cnn_forward.1} parent=1 // pred_check
      _
    $region31: #{cnn_forward.1} parent=1 // pred_check_branch
      %39 = sbr.rel (0) target = $region33
    $region32: #{cnn_forward.1} parent=1 // pred_region
      %41 = dma.done [#allocation3], 20480
    $region33: #{cnn_forward.1} parent=1 // pred_fallthru
      _
    %v42 = vld [vmem:[%s0] sm:$0xff]
    %v43 = vld [vmem:[%s0 + $0x8] sm:$0xff]
    %v44 = vld [vmem:[%s0 + $0x10] sm:$0xff]
    %v45 = vld [vmem:[%s0 + $0x18] sm:$0xff]
    %v46 = vld [vmem:[%s0 + $0x20] sm:$0xff]
    %v47 = vld [vmem:[%s0 + $0x28] sm:$0xff]
    %v48 = vld [vmem:[%s0 + $0x30] sm:$0xff]
    %v49 = vld [vmem:[%s0 + $0x38] sm:$0xff]
    %v50 = vld [vmem:[%s0 + $0x40] sm:$0xff]
    %v51 = vld [vmem:[%s0 + $0x48] sm:$0xff]
    %v52 = vld [vmem:[%s0 + $0x50] sm:$0xff]
    %v53 = vld [vmem:[%s0 + $0x58] sm:$0xff]
    %v54 = vld [vmem:[%s0 + $0x60] sm:$0xff]
    %v55 = vld [vmem:[%s0 + $0x68] sm:$0xff]
    %v56 = vld [vmem:[%s0 + $0x70] sm:$0xff]
    %v57 = vld [vmem:[%s0 + $0x78] sm:$0xff]
    %v58 = vld [vmem:[%s1] sm:$0xff]
    %v59 = vld [vmem:[%s1 + $0x8] sm:$0xff]
    %v60 = vld [vmem:[%s1 + $0x10] sm:$0xff]
    %v61 = vld [vmem:[%s1 + $0x18] sm:$0xff]
    %v62 = vld [vmem:[%s0 + $0x80] sm:$0xff]
    %s63 = scalar_lea.vmem %s1, 32
    %v64 = vld [vmem:[%s63] sm:$0xff]
    %v65 = vld [vmem:[%s63 + $0x8] sm:$0xff]
    %v66 = vld [vmem:[%s63 + $0x10] sm:$0xff]
    %v67 = vld [vmem:[%s63 + $0x18] sm:$0xff]
    %vm68 = vcmask 130048
    %v70 = vsel %vm68, %v43, 0
    %v73 = vsel %vm68, %v44, 0
    %v76 = vsel %vm68, %v45, 0
    %v79 = vsel %vm68, %v46, 0
    %v82 = vsel %vm68, %v47, 0
    %v85 = vsel %vm68, %v48, 0
    %v88 = vsel %vm68, %v49, 0
    %v91 = vsel %vm68, %v50, 0
    %v94 = vsel %vm68, %v51, 0
    %v97 = vsel %vm68, %v52, 0
    %v100 = vsel %vm68, %v53, 0
    %v103 = vsel %vm68, %v54, 0
    %v106 = vsel %vm68, %v55, 0
    %v109 = vsel %vm68, %v56, 0
    %v112 = vsel %vm68, %v57, 0
    %v115 = vsel %vm68, %v62, 0
    %117 = vmatpush.msra.mxu0 0.0
    %118 = vmatpush.msra.mxu0 0.0
    %119 = vmatpush.msra.mxu0 0.0
    %120 = vmatpush.msra.mxu0 0.0
    %121 = vmatpush.msra.mxu0 0.0
    %122 = vmatpush.msra.mxu0 0.0
    %123 = vmatpush.msra.mxu0 0.0
    %124 = vmatpush.msra.mxu0 0.0
    %125 = vmatpush.msra.mxu0 0.0
    %126 = vmatpush.msra.mxu0 0.0
    %127 = vmatpush.msra.mxu0 0.0
    %128 = vmatpush.msra.mxu0 0.0
    %129 = vmatpush.msra.mxu0 0.0
    %130 = vmatpush.msra.mxu0 0.0
    %131 = vmatpush.msra.mxu0 %v66
    %132 = vmatpush.msra.mxu0 %v64
    %133 = vmatmul.f32.gmra.mxu0 %v70
    %v134 = vpop.f32.mrf.mxu0
    %v135 = vadd.f32 0.0, %v134
    %136 = vmatmul.f32.gmra.mxu0 %v73
    %v137 = vpop.f32.mrf.mxu0
    %v138 = vadd.f32 0.0, %v137
    %139 = vmatmul.f32.gmra.mxu0 %v76
    %v140 = vpop.f32.mrf.mxu0
    %v141 = vadd.f32 0.0, %v140
    %142 = vmatmul.f32.gmra.mxu0 %v79
    %v143 = vpop.f32.mrf.mxu0
    %v144 = vadd.f32 0.0, %v143
    %145 = vmatmul.f32.gmra.mxu0 %v82
    %v146 = vpop.f32.mrf.mxu0
    %v147 = vadd.f32 0.0, %v146
    %148 = vmatmul.f32.gmra.mxu0 %v85
    %v149 = vpop.f32.mrf.mxu0
    %v150 = vadd.f32 0.0, %v149
    %151 = vmatmul.f32.gmra.mxu0 %v88
    %v152 = vpop.f32.mrf.mxu0
    %v153 = vadd.f32 0.0, %v152
    %154 = vmatmul.f32.gmra.mxu0 %v91
    %v155 = vpop.f32.mrf.mxu0
    %v156 = vadd.f32 0.0, %v155
    %157 = vmatmul.f32.gmra.mxu0 %v94
    %v158 = vpop.f32.mrf.mxu0
    %v159 = vadd.f32 0.0, %v158
    %160 = vmatmul.f32.gmra.mxu0 %v97
    %v161 = vpop.f32.mrf.mxu0
    %v162 = vadd.f32 0.0, %v161
    %163 = vmatmul.f32.gmra.mxu0 %v100
    %v164 = vpop.f32.mrf.mxu0
    %v165 = vadd.f32 0.0, %v164
    %166 = vmatmul.f32.gmra.mxu0 %v103
    %v167 = vpop.f32.mrf.mxu0
    %v168 = vadd.f32 0.0, %v167
    %169 = vmatmul.f32.gmra.mxu0 %v106
    %v170 = vpop.f32.mrf.mxu0
    %v171 = vadd.f32 0.0, %v170
    %172 = vmatmul.f32.gmra.mxu0 %v109
    %v173 = vpop.f32.mrf.mxu0
    %v174 = vadd.f32 0.0, %v173
    %175 = vmatmul.f32.gmra.mxu0 %v112
    %v176 = vpop.f32.mrf.mxu0
    %v177 = vadd.f32 0.0, %v176
    %178 = vmatmul.f32.gmra.mxu0 %v115
    %v179 = vpop.f32.mrf.mxu0
    %v180 = vadd.f32 0.0, %v179
    %181 = vdwg.mxu0
    %182 = vmatpush.msra.mxu0 0.0
    %183 = vmatpush.msra.mxu0 0.0
    %184 = vmatpush.msra.mxu0 0.0
    %185 = vmatpush.msra.mxu0 0.0
    %186 = vmatpush.msra.mxu0 0.0
    %187 = vmatpush.msra.mxu0 0.0
    %188 = vmatpush.msra.mxu0 0.0
    %189 = vmatpush.msra.mxu0 0.0
    %190 = vmatpush.msra.mxu0 0.0
    %191 = vmatpush.msra.mxu0 0.0
    %192 = vmatpush.msra.mxu0 0.0
    %193 = vmatpush.msra.mxu0 0.0
    %194 = vmatpush.msra.mxu0 0.0
    %195 = vmatpush.msra.mxu0 0.0
    %196 = vmatpush.msra.mxu0 %v67
    %197 = vmatpush.msra.mxu0 %v65
    %198 = vmatmul.f32.gmra.mxu0 %v70
    %v199 = vpop.f32.mrf.mxu0
    %v200 = vadd.f32 0.0, %v199
    %201 = vmatmul.f32.gmra.mxu0 %v73
    %v202 = vpop.f32.mrf.mxu0
    %v203 = vadd.f32 0.0, %v202
    %204 = vmatmul.f32.gmra.mxu0 %v76
    %v205 = vpop.f32.mrf.mxu0
    %v206 = vadd.f32 0.0, %v205
    %207 = vmatmul.f32.gmra.mxu0 %v79
    %v208 = vpop.f32.mrf.mxu0
    %v209 = vadd.f32 0.0, %v208
    %210 = vmatmul.f32.gmra.mxu0 %v82
    %v211 = vpop.f32.mrf.mxu0
    %v212 = vadd.f32 0.0, %v211
    %213 = vmatmul.f32.gmra.mxu0 %v85
    %v214 = vpop.f32.mrf.mxu0
    %v215 = vadd.f32 0.0, %v214
    %216 = vmatmul.f32.gmra.mxu0 %v88
    %v217 = vpop.f32.mrf.mxu0
    %v218 = vadd.f32 0.0, %v217
    %219 = vmatmul.f32.gmra.mxu0 %v91
    %v220 = vpop.f32.mrf.mxu0
    %v221 = vadd.f32 0.0, %v220
    %222 = vmatmul.f32.gmra.mxu0 %v94
    %v223 = vpop.f32.mrf.mxu0
    %v224 = vadd.f32 0.0, %v223
    %225 = vmatmul.f32.gmra.mxu0 %v97
    %v226 = vpop.f32.mrf.mxu0
    %v227 = vadd.f32 0.0, %v226
    %228 = vmatmul.f32.gmra.mxu0 %v100
    %v229 = vpop.f32.mrf.mxu0
    %v230 = vadd.f32 0.0, %v229
    %231 = vmatmul.f32.gmra.mxu0 %v103
    %v232 = vpop.f32.mrf.mxu0
    %v233 = vadd.f32 0.0, %v232
    %234 = vmatmul.f32.gmra.mxu0 %v106
    %v235 = vpop.f32.mrf.mxu0
    %v236 = vadd.f32 0.0, %v235
    %237 = vmatmul.f32.gmra.mxu0 %v109
    %v238 = vpop.f32.mrf.mxu0
    %v239 = vadd.f32 0.0, %v238
    %240 = vmatmul.f32.gmra.mxu0 %v112
    %v241 = vpop.f32.mrf.mxu0
    %v242 = vadd.f32 0.0, %v241
    %243 = vmatmul.f32.gmra.mxu0 %v115
    %v244 = vpop.f32.mrf.mxu0
    %v245 = vadd.f32 0.0, %v244
    %246 = vdwg.mxu0
    %v248 = vsel %vm68, %v42, 0
    %250 = vmatpush.msra.mxu0 0.0
    %251 = vmatpush.msra.mxu0 0.0
    %252 = vmatpush.msra.mxu0 0.0
    %253 = vmatpush.msra.mxu0 0.0
    %254 = vmatpush.msra.mxu0 0.0
    %255 = vmatpush.msra.mxu0 0.0
    %256 = vmatpush.msra.mxu0 0.0
    %257 = vmatpush.msra.mxu0 0.0
    %258 = vmatpush.msra.mxu0 0.0
    %259 = vmatpush.msra.mxu0 0.0
    %260 = vmatpush.msra.mxu0 0.0
    %261 = vmatpush.msra.mxu0 0.0
    %262 = vmatpush.msra.mxu0 0.0
    %263 = vmatpush.msra.mxu0 0.0
    %264 = vmatpush.msra.mxu0 %v60
    %265 = vmatpush.msra.mxu0 %v58
    %266 = vmatmul.f32.gmra.mxu0 %v248
    %v267 = vpop.f32.mrf.mxu0
    %v268 = vadd.f32 %v135, %v267
    %269 = vmatmul.f32.gmra.mxu0 %v70
    %v270 = vpop.f32.mrf.mxu0
    %v271 = vadd.f32 %v138, %v270
    %272 = vmatmul.f32.gmra.mxu0 %v73
    %v273 = vpop.f32.mrf.mxu0
    %v274 = vadd.f32 %v141, %v273
    %275 = vmatmul.f32.gmra.mxu0 %v76
    %v276 = vpop.f32.mrf.mxu0
    %v277 = vadd.f32 %v144, %v276
    %278 = vmatmul.f32.gmra.mxu0 %v79
    %v279 = vpop.f32.mrf.mxu0
    %v280 = vadd.f32 %v147, %v279
    %281 = vmatmul.f32.gmra.mxu0 %v82
    %v282 = vpop.f32.mrf.mxu0
    %v283 = vadd.f32 %v150, %v282
    %284 = vmatmul.f32.gmra.mxu0 %v85
    %v285 = vpop.f32.mrf.mxu0
    %v286 = vadd.f32 %v153, %v285
    %287 = vmatmul.f32.gmra.mxu0 %v88
    %v288 = vpop.f32.mrf.mxu0
    %v289 = vadd.f32 %v156, %v288
    %290 = vmatmul.f32.gmra.mxu0 %v91
    %v291 = vpop.f32.mrf.mxu0
    %v292 = vadd.f32 %v159, %v291
    %293 = vmatmul.f32.gmra.mxu0 %v94
    %v294 = vpop.f32.mrf.mxu0
    %v295 = vadd.f32 %v162, %v294
    %296 = vmatmul.f32.gmra.mxu0 %v97
    %v297 = vpop.f32.mrf.mxu0
    %v298 = vadd.f32 %v165, %v297
    %299 = vmatmul.f32.gmra.mxu0 %v100
    %v300 = vpop.f32.mrf.mxu0
    %v301 = vadd.f32 %v168, %v300
    %302 = vmatmul.f32.gmra.mxu0 %v103
    %v303 = vpop.f32.mrf.mxu0
    %v304 = vadd.f32 %v171, %v303
    %305 = vmatmul.f32.gmra.mxu0 %v106
    %v306 = vpop.f32.mrf.mxu0
    %v307 = vadd.f32 %v174, %v306
    %308 = vmatmul.f32.gmra.mxu0 %v109
    %v309 = vpop.f32.mrf.mxu0
    %v310 = vadd.f32 %v177, %v309
    %311 = vmatmul.f32.gmra.mxu0 %v112
    %v312 = vpop.f32.mrf.mxu0
    %v313 = vadd.f32 %v180, %v312
    %314 = vdwg.mxu0
    %315 = vmatpush.msra.mxu0 0.0
    %316 = vmatpush.msra.mxu0 0.0
    %317 = vmatpush.msra.mxu0 0.0
    %318 = vmatpush.msra.mxu0 0.0
    %319 = vmatpush.msra.mxu0 0.0
    %320 = vmatpush.msra.mxu0 0.0
    %321 = vmatpush.msra.mxu0 0.0
    %322 = vmatpush.msra.mxu0 0.0
    %323 = vmatpush.msra.mxu0 0.0
    %324 = vmatpush.msra.mxu0 0.0
    %325 = vmatpush.msra.mxu0 0.0
    %326 = vmatpush.msra.mxu0 0.0
    %327 = vmatpush.msra.mxu0 0.0
    %328 = vmatpush.msra.mxu0 0.0
    %329 = vmatpush.msra.mxu0 %v61
    %330 = vmatpush.msra.mxu0 %v59
    %331 = vmatmul.f32.gmra.mxu0 %v248
    %v332 = vpop.f32.mrf.mxu0
    %v333 = vadd.f32 %v200, %v332
    %334 = vmatmul.f32.gmra.mxu0 %v70
    %v335 = vpop.f32.mrf.mxu0
    %v336 = vadd.f32 %v203, %v335
    %337 = vmatmul.f32.gmra.mxu0 %v73
    %v338 = vpop.f32.mrf.mxu0
    %v339 = vadd.f32 %v206, %v338
    %340 = vmatmul.f32.gmra.mxu0 %v76
    %v341 = vpop.f32.mrf.mxu0
    %v342 = vadd.f32 %v209, %v341
    %343 = vmatmul.f32.gmra.mxu0 %v79
    %v344 = vpop.f32.mrf.mxu0
    %v345 = vadd.f32 %v212, %v344
    %346 = vmatmul.f32.gmra.mxu0 %v82
    %v347 = vpop.f32.mrf.mxu0
    %v348 = vadd.f32 %v215, %v347
    %349 = vmatmul.f32.gmra.mxu0 %v85
    %v350 = vpop.f32.mrf.mxu0
    %v351 = vadd.f32 %v218, %v350
    %352 = vmatmul.f32.gmra.mxu0 %v88
    %v353 = vpop.f32.mrf.mxu0
    %v354 = vadd.f32 %v221, %v353
    %355 = vmatmul.f32.gmra.mxu0 %v91
    %v356 = vpop.f32.mrf.mxu0
    %v357 = vadd.f32 %v224, %v356
    %358 = vmatmul.f32.gmra.mxu0 %v94
    %v359 = vpop.f32.mrf.mxu0
    %v360 = vadd.f32 %v227, %v359
    %361 = vmatmul.f32.gmra.mxu0 %v97
    %v362 = vpop.f32.mrf.mxu0
    %v363 = vadd.f32 %v230, %v362
    %364 = vmatmul.f32.gmra.mxu0 %v100
    %v365 = vpop.f32.mrf.mxu0
    %v366 = vadd.f32 %v233, %v365
    %367 = vmatmul.f32.gmra.mxu0 %v103
    %v368 = vpop.f32.mrf.mxu0
    %v369 = vadd.f32 %v236, %v368
    %370 = vmatmul.f32.gmra.mxu0 %v106
    %v371 = vpop.f32.mrf.mxu0
    %v372 = vadd.f32 %v239, %v371
    %373 = vmatmul.f32.gmra.mxu0 %v109
    %v374 = vpop.f32.mrf.mxu0
    %v375 = vadd.f32 %v242, %v374
    %376 = vmatmul.f32.gmra.mxu0 %v112
    %v377 = vpop.f32.mrf.mxu0
    %v378 = vadd.f32 %v245, %v377
    %379 = vdwg.mxu0
    %v380 = vld [vmem:[%s0 + $0x10] sm:$0xff]
    %v381 = vld [vmem:[%s0 + $0x18] sm:$0xff]
    %v382 = vld [vmem:[%s0 + $0x20] sm:$0xff]
    %v383 = vld [vmem:[%s0 + $0x28] sm:$0xff]
    %v384 = vld [vmem:[%s0 + $0x30] sm:$0xff]
    %v385 = vld [vmem:[%s0 + $0x38] sm:$0xff]
    %v386 = vld [vmem:[%s0 + $0x40] sm:$0xff]
    %v387 = vld [vmem:[%s0 + $0x48] sm:$0xff]
    %v388 = vld [vmem:[%s0 + $0x50] sm:$0xff]
    %v389 = vld [vmem:[%s0 + $0x58] sm:$0xff]
    %v390 = vld [vmem:[%s0 + $0x60] sm:$0xff]
    %v391 = vld [vmem:[%s0 + $0x68] sm:$0xff]
    %v392 = vld [vmem:[%s0 + $0x70] sm:$0xff]
    %v393 = vld [vmem:[%s0 + $0x78] sm:$0xff]
    %v394 = vld [vmem:[%s0 + $0x80] sm:$0xff]
    %v395 = vld [vmem:[%s0 + $0x88] sm:$0xff]
    %s396 = scalar_lea.vmem %s1, 64
    %v397 = vld [vmem:[%s396] sm:$0xff]
    %v398 = vld [vmem:[%s396 + $0x8] sm:$0xff]
    %v399 = vld [vmem:[%s396 + $0x10] sm:$0xff]
    %v400 = vld [vmem:[%s396 + $0x18] sm:$0xff]
    %v402 = vsel %vm68, %v380, 0
    %v405 = vsel %vm68, %v381, 0
    %v408 = vsel %vm68, %v382, 0
    %v411 = vsel %vm68, %v383, 0
    %v414 = vsel %vm68, %v384, 0
    %v417 = vsel %vm68, %v385, 0
    %v420 = vsel %vm68, %v386, 0
    %v423 = vsel %vm68, %v387, 0
    %v426 = vsel %vm68, %v388, 0
    %v429 = vsel %vm68, %v389, 0
    %v432 = vsel %vm68, %v390, 0
    %v435 = vsel %vm68, %v391, 0
    %v438 = vsel %vm68, %v392, 0
    %v441 = vsel %vm68, %v393, 0
    %v444 = vsel %vm68, %v394, 0
    %v447 = vsel %vm68, %v395, 0
    %449 = vmatpush.msra.mxu0 0.0
    %450 = vmatpush.msra.mxu0 0.0
    %451 = vmatpush.msra.mxu0 0.0
    %452 = vmatpush.msra.mxu0 0.0
    %453 = vmatpush.msra.mxu0 0.0
    %454 = vmatpush.msra.mxu0 0.0
    %455 = vmatpush.msra.mxu0 0.0
    %456 = vmatpush.msra.mxu0 0.0
    %457 = vmatpush.msra.mxu0 0.0
    %458 = vmatpush.msra.mxu0 0.0
    %459 = vmatpush.msra.mxu0 0.0
    %460 = vmatpush.msra.mxu0 0.0
    %461 = vmatpush.msra.mxu0 0.0
    %462 = vmatpush.msra.mxu0 0.0
    %463 = vmatpush.msra.mxu0 %v399
    %464 = vmatpush.msra.mxu0 %v397
    %465 = vmatmul.f32.gmra.mxu0 %v402
    %v466 = vpop.f32.mrf.mxu0
    %v467 = vadd.f32 0.0, %v466
    %468 = vmatmul.f32.gmra.mxu0 %v405
    %v469 = vpop.f32.mrf.mxu0
    %v470 = vadd.f32 0.0, %v469
    %471 = vmatmul.f32.gmra.mxu0 %v408
    %v472 = vpop.f32.mrf.mxu0
    %v473 = vadd.f32 0.0, %v472
    %474 = vmatmul.f32.gmra.mxu0 %v411
    %v475 = vpop.f32.mrf.mxu0
    %v476 = vadd.f32 0.0, %v475
    %477 = vmatmul.f32.gmra.mxu0 %v414
    %v478 = vpop.f32.mrf.mxu0
    %v479 = vadd.f32 0.0, %v478
    %480 = vmatmul.f32.gmra.mxu0 %v417
    %v481 = vpop.f32.mrf.mxu0
    %v482 = vadd.f32 0.0, %v481
    %483 = vmatmul.f32.gmra.mxu0 %v420
    %v484 = vpop.f32.mrf.mxu0
    %v485 = vadd.f32 0.0, %v484
    %486 = vmatmul.f32.gmra.mxu0 %v423
    %v487 = vpop.f32.mrf.mxu0
    %v488 = vadd.f32 0.0, %v487
    %489 = vmatmul.f32.gmra.mxu0 %v426
    %v490 = vpop.f32.mrf.mxu0
    %v491 = vadd.f32 0.0, %v490
    %492 = vmatmul.f32.gmra.mxu0 %v429
    %v493 = vpop.f32.mrf.mxu0
    %v494 = vadd.f32 0.0, %v493
    %495 = vmatmul.f32.gmra.mxu0 %v432
    %v496 = vpop.f32.mrf.mxu0
    %v497 = vadd.f32 0.0, %v496
    %498 = vmatmul.f32.gmra.mxu0 %v435
    %v499 = vpop.f32.mrf.mxu0
    %v500 = vadd.f32 0.0, %v499
    %501 = vmatmul.f32.gmra.mxu0 %v438
    %v502 = vpop.f32.mrf.mxu0
    %v503 = vadd.f32 0.0, %v502
    %504 = vmatmul.f32.gmra.mxu0 %v441
    %v505 = vpop.f32.mrf.mxu0
    %v506 = vadd.f32 0.0, %v505
    %507 = vmatmul.f32.gmra.mxu0 %v444
    %v508 = vpop.f32.mrf.mxu0
    %v509 = vadd.f32 0.0, %v508
    %510 = vmatmul.f32.gmra.mxu0 %v447
    %v511 = vpop.f32.mrf.mxu0
    %v512 = vadd.f32 0.0, %v511
    %513 = vdwg.mxu0
    %514 = vmatpush.msra.mxu0 0.0
    %515 = vmatpush.msra.mxu0 0.0
    %516 = vmatpush.msra.mxu0 0.0
    %517 = vmatpush.msra.mxu0 0.0
    %518 = vmatpush.msra.mxu0 0.0
    %519 = vmatpush.msra.mxu0 0.0
    %520 = vmatpush.msra.mxu0 0.0
    %521 = vmatpush.msra.mxu0 0.0
    %522 = vmatpush.msra.mxu0 0.0
    %523 = vmatpush.msra.mxu0 0.0
    %524 = vmatpush.msra.mxu0 0.0
    %525 = vmatpush.msra.mxu0 0.0
    %526 = vmatpush.msra.mxu0 0.0
    %527 = vmatpush.msra.mxu0 0.0
    %528 = vmatpush.msra.mxu0 %v400
    %529 = vmatpush.msra.mxu0 %v398
    %530 = vmatmul.f32.gmra.mxu0 %v402
    %v531 = vpop.f32.mrf.mxu0
    %v532 = vadd.f32 0.0, %v531
    %533 = vmatmul.f32.gmra.mxu0 %v405
    %v534 = vpop.f32.mrf.mxu0
    %v535 = vadd.f32 0.0, %v534
    %536 = vmatmul.f32.gmra.mxu0 %v408
    %v537 = vpop.f32.mrf.mxu0
    %v538 = vadd.f32 0.0, %v537
    %539 = vmatmul.f32.gmra.mxu0 %v411
    %v540 = vpop.f32.mrf.mxu0
    %v541 = vadd.f32 0.0, %v540
    %542 = vmatmul.f32.gmra.mxu0 %v414
    %v543 = vpop.f32.mrf.mxu0
    %v544 = vadd.f32 0.0, %v543
    %545 = vmatmul.f32.gmra.mxu0 %v417
    %v546 = vpop.f32.mrf.mxu0
    %v547 = vadd.f32 0.0, %v546
    %548 = vmatmul.f32.gmra.mxu0 %v420
    %v549 = vpop.f32.mrf.mxu0
    %v550 = vadd.f32 0.0, %v549
    %551 = vmatmul.f32.gmra.mxu0 %v423
    %v552 = vpop.f32.mrf.mxu0
    %v553 = vadd.f32 0.0, %v552
    %554 = vmatmul.f32.gmra.mxu0 %v426
    %v555 = vpop.f32.mrf.mxu0
    %v556 = vadd.f32 0.0, %v555
    %557 = vmatmul.f32.gmra.mxu0 %v429
    %v558 = vpop.f32.mrf.mxu0
    %v559 = vadd.f32 0.0, %v558
    %560 = vmatmul.f32.gmra.mxu0 %v432
    %v561 = vpop.f32.mrf.mxu0
    %v562 = vadd.f32 0.0, %v561
    %563 = vmatmul.f32.gmra.mxu0 %v435
    %v564 = vpop.f32.mrf.mxu0
    %v565 = vadd.f32 0.0, %v564
    %566 = vmatmul.f32.gmra.mxu0 %v438
    %v567 = vpop.f32.mrf.mxu0
    %v568 = vadd.f32 0.0, %v567
    %569 = vmatmul.f32.gmra.mxu0 %v441
    %v570 = vpop.f32.mrf.mxu0
    %v571 = vadd.f32 0.0, %v570
    %572 = vmatmul.f32.gmra.mxu0 %v444
    %v573 = vpop.f32.mrf.mxu0
    %v574 = vadd.f32 0.0, %v573
    %575 = vmatmul.f32.gmra.mxu0 %v447
    %v576 = vpop.f32.mrf.mxu0
    %v577 = vadd.f32 0.0, %v576
    %578 = vdwg.mxu0
    %v579 = vadd.f32 %v268, %v467
    %v580 = vadd.f32 %v333, %v532
    %v581 = vadd.f32 %v271, %v470
    %v582 = vadd.f32 %v336, %v535
    %v583 = vadd.f32 %v274, %v473
    %v584 = vadd.f32 %v339, %v538
    %v585 = vadd.f32 %v277, %v476
    %v586 = vadd.f32 %v342, %v541
    %v587 = vadd.f32 %v280, %v479
    %v588 = vadd.f32 %v345, %v544
    %v589 = vadd.f32 %v283, %v482
    %v590 = vadd.f32 %v348, %v547
    %v591 = vadd.f32 %v286, %v485
    %v592 = vadd.f32 %v351, %v550
    %v593 = vadd.f32 %v289, %v488
    %v594 = vadd.f32 %v354, %v553
    %v595 = vadd.f32 %v292, %v491
    %v596 = vadd.f32 %v357, %v556
    %v597 = vadd.f32 %v295, %v494
    %v598 = vadd.f32 %v360, %v559
    %v599 = vadd.f32 %v298, %v497
    %v600 = vadd.f32 %v363, %v562
    %v601 = vadd.f32 %v301, %v500
    %v602 = vadd.f32 %v366, %v565
    %v603 = vadd.f32 %v304, %v503
    %v604 = vadd.f32 %v369, %v568
    %v605 = vadd.f32 %v307, %v506
    %v606 = vadd.f32 %v372, %v571
    %v607 = vadd.f32 %v310, %v509
    %v608 = vadd.f32 %v375, %v574
    %v609 = vadd.f32 %v313, %v512
    %v610 = vadd.f32 %v378, %v577
    %v611 = vld [vmem:[%s0 + $0x18] sm:$0xff]
    %v612 = vld [vmem:[%s0 + $0x20] sm:$0xff]
    %v613 = vld [vmem:[%s0 + $0x28] sm:$0xff]
    %v614 = vld [vmem:[%s0 + $0x30] sm:$0xff]
    %v615 = vld [vmem:[%s0 + $0x38] sm:$0xff]
    %v616 = vld [vmem:[%s0 + $0x40] sm:$0xff]
    %v617 = vld [vmem:[%s0 + $0x48] sm:$0xff]
    %v618 = vld [vmem:[%s0 + $0x50] sm:$0xff]
    %v619 = vld [vmem:[%s0 + $0x58] sm:$0xff]
    %v620 = vld [vmem:[%s0 + $0x60] sm:$0xff]
    %v621 = vld [vmem:[%s0 + $0x68] sm:$0xff]
    %v622 = vld [vmem:[%s0 + $0x70] sm:$0xff]
    %v623 = vld [vmem:[%s0 + $0x78] sm:$0xff]
    %v624 = vld [vmem:[%s0 + $0x80] sm:$0xff]
    %v625 = vld [vmem:[%s0 + $0x88] sm:$0xff]
    %v626 = vld [vmem:[%s0 + $0x90] sm:$0xff]
    %s627 = scalar_lea.vmem %s1, 96
    %v628 = vld [vmem:[%s627] sm:$0xff]
    %v629 = vld [vmem:[%s627 + $0x8] sm:$0xff]
    %v630 = vld [vmem:[%s627 + $0x10] sm:$0xff]
    %v631 = vld [vmem:[%s627 + $0x18] sm:$0xff]
    %v633 = vsel %vm68, %v611, 0
    %v636 = vsel %vm68, %v612, 0
    %v639 = vsel %vm68, %v613, 0
    %v642 = vsel %vm68, %v614, 0
    %v645 = vsel %vm68, %v615, 0
    %v648 = vsel %vm68, %v616, 0
    %v651 = vsel %vm68, %v617, 0
    %v654 = vsel %vm68, %v618, 0
    %v657 = vsel %vm68, %v619, 0
    %v660 = vsel %vm68, %v620, 0
    %v663 = vsel %vm68, %v621, 0
    %v666 = vsel %vm68, %v622, 0
    %v669 = vsel %vm68, %v623, 0
    %v672 = vsel %vm68, %v624, 0
    %v675 = vsel %vm68, %v625, 0
    %v678 = vsel %vm68, %v626, 0
    %680 = vmatpush.msra.mxu0 0.0
    %681 = vmatpush.msra.mxu0 0.0
    %682 = vmatpush.msra.mxu0 0.0
    %683 = vmatpush.msra.mxu0 0.0
    %684 = vmatpush.msra.mxu0 0.0
    %685 = vmatpush.msra.mxu0 0.0
    %686 = vmatpush.msra.mxu0 0.0
    %687 = vmatpush.msra.mxu0 0.0
    %688 = vmatpush.msra.mxu0 0.0
    %689 = vmatpush.msra.mxu0 0.0
    %690 = vmatpush.msra.mxu0 0.0
    %691 = vmatpush.msra.mxu0 0.0
    %692 = vmatpush.msra.mxu0 0.0
    %693 = vmatpush.msra.mxu0 0.0
    %694 = vmatpush.msra.mxu0 %v630
    %695 = vmatpush.msra.mxu0 %v628
    %696 = vmatmul.f32.gmra.mxu0 %v633
    %v697 = vpop.f32.mrf.mxu0
    %v698 = vadd.f32 0.0, %v697
    %699 = vmatmul.f32.gmra.mxu0 %v636
    %v700 = vpop.f32.mrf.mxu0
    %v701 = vadd.f32 0.0, %v700
    %702 = vmatmul.f32.gmra.mxu0 %v639
    %v703 = vpop.f32.mrf.mxu0
    %v704 = vadd.f32 0.0, %v703
    %705 = vmatmul.f32.gmra.mxu0 %v642
    %v706 = vpop.f32.mrf.mxu0
    %v707 = vadd.f32 0.0, %v706
    %708 = vmatmul.f32.gmra.mxu0 %v645
    %v709 = vpop.f32.mrf.mxu0
    %v710 = vadd.f32 0.0, %v709
    %711 = vmatmul.f32.gmra.mxu0 %v648
    %v712 = vpop.f32.mrf.mxu0
    %v713 = vadd.f32 0.0, %v712
    %714 = vmatmul.f32.gmra.mxu0 %v651
    %v715 = vpop.f32.mrf.mxu0
    %v716 = vadd.f32 0.0, %v715
    %717 = vmatmul.f32.gmra.mxu0 %v654
    %v718 = vpop.f32.mrf.mxu0
    %v719 = vadd.f32 0.0, %v718
    %720 = vmatmul.f32.gmra.mxu0 %v657
    %v721 = vpop.f32.mrf.mxu0
    %v722 = vadd.f32 0.0, %v721
    %723 = vmatmul.f32.gmra.mxu0 %v660
    %v724 = vpop.f32.mrf.mxu0
    %v725 = vadd.f32 0.0, %v724
    %726 = vmatmul.f32.gmra.mxu0 %v663
    %v727 = vpop.f32.mrf.mxu0
    %v728 = vadd.f32 0.0, %v727
    %729 = vmatmul.f32.gmra.mxu0 %v666
    %v730 = vpop.f32.mrf.mxu0
    %v731 = vadd.f32 0.0, %v730
    %732 = vmatmul.f32.gmra.mxu0 %v669
    %v733 = vpop.f32.mrf.mxu0
    %v734 = vadd.f32 0.0, %v733
    %735 = vmatmul.f32.gmra.mxu0 %v672
    %v736 = vpop.f32.mrf.mxu0
    %v737 = vadd.f32 0.0, %v736
    %738 = vmatmul.f32.gmra.mxu0 %v675
    %v739 = vpop.f32.mrf.mxu0
    %v740 = vadd.f32 0.0, %v739
    %741 = vmatmul.f32.gmra.mxu0 %v678
    %v742 = vpop.f32.mrf.mxu0
    %v743 = vadd.f32 0.0, %v742
    %744 = vdwg.mxu0
    %745 = vmatpush.msra.mxu0 0.0
    %746 = vmatpush.msra.mxu0 0.0
    %747 = vmatpush.msra.mxu0 0.0
    %748 = vmatpush.msra.mxu0 0.0
    %749 = vmatpush.msra.mxu0 0.0
    %750 = vmatpush.msra.mxu0 0.0
    %751 = vmatpush.msra.mxu0 0.0
    %752 = vmatpush.msra.mxu0 0.0
    %753 = vmatpush.msra.mxu0 0.0
    %754 = vmatpush.msra.mxu0 0.0
    %755 = vmatpush.msra.mxu0 0.0
    %756 = vmatpush.msra.mxu0 0.0
    %757 = vmatpush.msra.mxu0 0.0
    %758 = vmatpush.msra.mxu0 0.0
    %759 = vmatpush.msra.mxu0 %v631
    %760 = vmatpush.msra.mxu0 %v629
    %761 = vmatmul.f32.gmra.mxu0 %v633
    %v762 = vpop.f32.mrf.mxu0
    %v763 = vadd.f32 0.0, %v762
    %764 = vmatmul.f32.gmra.mxu0 %v636
    %v765 = vpop.f32.mrf.mxu0
    %v766 = vadd.f32 0.0, %v765
    %767 = vmatmul.f32.gmra.mxu0 %v639
    %v768 = vpop.f32.mrf.mxu0
    %v769 = vadd.f32 0.0, %v768
    %770 = vmatmul.f32.gmra.mxu0 %v642
    %v771 = vpop.f32.mrf.mxu0
    %v772 = vadd.f32 0.0, %v771
    %773 = vmatmul.f32.gmra.mxu0 %v645
    %v774 = vpop.f32.mrf.mxu0
    %v775 = vadd.f32 0.0, %v774
    %776 = vmatmul.f32.gmra.mxu0 %v648
    %v777 = vpop.f32.mrf.mxu0
    %v778 = vadd.f32 0.0, %v777
    %779 = vmatmul.f32.gmra.mxu0 %v651
    %v780 = vpop.f32.mrf.mxu0
    %v781 = vadd.f32 0.0, %v780
    %782 = vmatmul.f32.gmra.mxu0 %v654
    %v783 = vpop.f32.mrf.mxu0
    %v784 = vadd.f32 0.0, %v783
    %785 = vmatmul.f32.gmra.mxu0 %v657
    %v786 = vpop.f32.mrf.mxu0
    %v787 = vadd.f32 0.0, %v786
    %788 = vmatmul.f32.gmra.mxu0 %v660
    %v789 = vpop.f32.mrf.mxu0
    %v790 = vadd.f32 0.0, %v789
    %791 = vmatmul.f32.gmra.mxu0 %v663
    %v792 = vpop.f32.mrf.mxu0
    %v793 = vadd.f32 0.0, %v792
    %794 = vmatmul.f32.gmra.mxu0 %v666
    %v795 = vpop.f32.mrf.mxu0
    %v796 = vadd.f32 0.0, %v795
    %797 = vmatmul.f32.gmra.mxu0 %v669
    %v798 = vpop.f32.mrf.mxu0
    %v799 = vadd.f32 0.0, %v798
    %800 = vmatmul.f32.gmra.mxu0 %v672
    %v801 = vpop.f32.mrf.mxu0
    %v802 = vadd.f32 0.0, %v801
    %803 = vmatmul.f32.gmra.mxu0 %v675
    %v804 = vpop.f32.mrf.mxu0
    %v805 = vadd.f32 0.0, %v804
    %806 = vmatmul.f32.gmra.mxu0 %v678
    %v807 = vpop.f32.mrf.mxu0
    %v808 = vadd.f32 0.0, %v807
    %809 = vdwg.mxu0
    %v810 = vadd.f32 %v579, %v698
    %v811 = vadd.f32 %v580, %v763
    %v812 = vadd.f32 %v581, %v701
    %v813 = vadd.f32 %v582, %v766
    %v814 = vadd.f32 %v583, %v704
    %v815 = vadd.f32 %v584, %v769
    %v816 = vadd.f32 %v585, %v707
    %v817 = vadd.f32 %v586, %v772
    %v818 = vadd.f32 %v587, %v710
    %v819 = vadd.f32 %v588, %v775
    %v820 = vadd.f32 %v589, %v713
    %v821 = vadd.f32 %v590, %v778
    %v822 = vadd.f32 %v591, %v716
    %v823 = vadd.f32 %v592, %v781
    %v824 = vadd.f32 %v593, %v719
    %v825 = vadd.f32 %v594, %v784
    %v826 = vadd.f32 %v595, %v722
    %v827 = vadd.f32 %v596, %v787
    %v828 = vadd.f32 %v597, %v725
    %v829 = vadd.f32 %v598, %v790
    %v830 = vadd.f32 %v599, %v728
    %v831 = vadd.f32 %v600, %v793
    %v832 = vadd.f32 %v601, %v731
    %v833 = vadd.f32 %v602, %v796
    %v834 = vadd.f32 %v603, %v734
    %v835 = vadd.f32 %v604, %v799
    %v836 = vadd.f32 %v605, %v737
    %v837 = vadd.f32 %v606, %v802
    %v838 = vadd.f32 %v607, %v740
    %v839 = vadd.f32 %v608, %v805
    %v840 = vadd.f32 %v609, %v743
    %v841 = vadd.f32 %v610, %v808
    %v842 = vld [vmem:[%s0 + $0x20] sm:$0xff]
    %v843 = vld [vmem:[%s0 + $0x28] sm:$0xff]
    %v844 = vld [vmem:[%s0 + $0x30] sm:$0xff]
    %v845 = vld [vmem:[%s0 + $0x38] sm:$0xff]
    %v846 = vld [vmem:[%s0 + $0x40] sm:$0xff]
    %v847 = vld [vmem:[%s0 + $0x48] sm:$0xff]
    %v848 = vld [vmem:[%s0 + $0x50] sm:$0xff]
    %v849 = vld [vmem:[%s0 + $0x58] sm:$0xff]
    %v850 = vld [vmem:[%s0 + $0x60] sm:$0xff]
    %v851 = vld [vmem:[%s0 + $0x68] sm:$0xff]
    %v852 = vld [vmem:[%s0 + $0x70] sm:$0xff]
    %v853 = vld [vmem:[%s0 + $0x78] sm:$0xff]
    %v854 = vld [vmem:[%s0 + $0x80] sm:$0xff]
    %v855 = vld [vmem:[%s0 + $0x88] sm:$0xff]
    %v856 = vld [vmem:[%s0 + $0x90] sm:$0xff]
    %v857 = vld [vmem:[%s0 + $0x98] sm:$0xff]
    %s858 = scalar_lea.vmem %s1, 128
    %v859 = vld [vmem:[%s858] sm:$0xff]
    %v860 = vld [vmem:[%s858 + $0x8] sm:$0xff]
    %v861 = vld [vmem:[%s858 + $0x10] sm:$0xff]
    %v862 = vld [vmem:[%s858 + $0x18] sm:$0xff]
    %v864 = vsel %vm68, %v842, 0
    %v867 = vsel %vm68, %v843, 0
    %v870 = vsel %vm68, %v844, 0
    %v873 = vsel %vm68, %v845, 0
    %v876 = vsel %vm68, %v846, 0
    %v879 = vsel %vm68, %v847, 0
    %v882 = vsel %vm68, %v848, 0
    %v885 = vsel %vm68, %v849, 0
    %v888 = vsel %vm68, %v850, 0
    %v891 = vsel %vm68, %v851, 0
    %v894 = vsel %vm68, %v852, 0
    %v897 = vsel %vm68, %v853, 0
    %v900 = vsel %vm68, %v854, 0
    %v903 = vsel %vm68, %v855, 0
    %v906 = vsel %vm68, %v856, 0
    %v909 = vsel %vm68, %v857, 0
    %911 = vmatpush.msra.mxu0 0.0
    %912 = vmatpush.msra.mxu0 0.0
    %913 = vmatpush.msra.mxu0 0.0
    %914 = vmatpush.msra.mxu0 0.0
    %915 = vmatpush.msra.mxu0 0.0
    %916 = vmatpush.msra.mxu0 0.0
    %917 = vmatpush.msra.mxu0 0.0
    %918 = vmatpush.msra.mxu0 0.0
    %919 = vmatpush.msra.mxu0 0.0
    %920 = vmatpush.msra.mxu0 0.0
    %921 = vmatpush.msra.mxu0 0.0
    %922 = vmatpush.msra.mxu0 0.0
    %923 = vmatpush.msra.mxu0 0.0
    %924 = vmatpush.msra.mxu0 0.0
    %925 = vmatpush.msra.mxu0 %v861
    %926 = vmatpush.msra.mxu0 %v859
    %927 = vmatmul.f32.gmra.mxu0 %v864
    %v928 = vpop.f32.mrf.mxu0
    %v929 = vadd.f32 0.0, %v928
    %930 = vmatmul.f32.gmra.mxu0 %v867
    %v931 = vpop.f32.mrf.mxu0
    %v932 = vadd.f32 0.0, %v931
    %933 = vmatmul.f32.gmra.mxu0 %v870
    %v934 = vpop.f32.mrf.mxu0
    %v935 = vadd.f32 0.0, %v934
    %936 = vmatmul.f32.gmra.mxu0 %v873
    %v937 = vpop.f32.mrf.mxu0
    %v938 = vadd.f32 0.0, %v937
    %939 = vmatmul.f32.gmra.mxu0 %v876
    %v940 = vpop.f32.mrf.mxu0
    %v941 = vadd.f32 0.0, %v940
    %942 = vmatmul.f32.gmra.mxu0 %v879
    %v943 = vpop.f32.mrf.mxu0
    %v944 = vadd.f32 0.0, %v943
    %945 = vmatmul.f32.gmra.mxu0 %v882
    %v946 = vpop.f32.mrf.mxu0
    %v947 = vadd.f32 0.0, %v946
    %948 = vmatmul.f32.gmra.mxu0 %v885
    %v949 = vpop.f32.mrf.mxu0
    %v950 = vadd.f32 0.0, %v949
    %951 = vmatmul.f32.gmra.mxu0 %v888
    %v952 = vpop.f32.mrf.mxu0
    %v953 = vadd.f32 0.0, %v952
    %954 = vmatmul.f32.gmra.mxu0 %v891
    %v955 = vpop.f32.mrf.mxu0
    %v956 = vadd.f32 0.0, %v955
    %957 = vmatmul.f32.gmra.mxu0 %v894
    %v958 = vpop.f32.mrf.mxu0
    %v959 = vadd.f32 0.0, %v958
    %960 = vmatmul.f32.gmra.mxu0 %v897
    %v961 = vpop.f32.mrf.mxu0
    %v962 = vadd.f32 0.0, %v961
    %963 = vmatmul.f32.gmra.mxu0 %v900
    %v964 = vpop.f32.mrf.mxu0
    %v965 = vadd.f32 0.0, %v964
    %966 = vmatmul.f32.gmra.mxu0 %v903
    %v967 = vpop.f32.mrf.mxu0
    %v968 = vadd.f32 0.0, %v967
    %969 = vmatmul.f32.gmra.mxu0 %v906
    %v970 = vpop.f32.mrf.mxu0
    %v971 = vadd.f32 0.0, %v970
    %972 = vmatmul.f32.gmra.mxu0 %v909
    %v973 = vpop.f32.mrf.mxu0
    %v974 = vadd.f32 0.0, %v973
    %975 = vdwg.mxu0
    %976 = vmatpush.msra.mxu0 0.0
    %977 = vmatpush.msra.mxu0 0.0
    %978 = vmatpush.msra.mxu0 0.0
    %979 = vmatpush.msra.mxu0 0.0
    %980 = vmatpush.msra.mxu0 0.0
    %981 = vmatpush.msra.mxu0 0.0
    %982 = vmatpush.msra.mxu0 0.0
    %983 = vmatpush.msra.mxu0 0.0
    %984 = vmatpush.msra.mxu0 0.0
    %985 = vmatpush.msra.mxu0 0.0
    %986 = vmatpush.msra.mxu0 0.0
    %987 = vmatpush.msra.mxu0 0.0
    %988 = vmatpush.msra.mxu0 0.0
    %989 = vmatpush.msra.mxu0 0.0
    %990 = vmatpush.msra.mxu0 %v862
    %991 = vmatpush.msra.mxu0 %v860
    %992 = vmatmul.f32.gmra.mxu0 %v864
    %v993 = vpop.f32.mrf.mxu0
    %v994 = vadd.f32 0.0, %v993
    %995 = vmatmul.f32.gmra.mxu0 %v867
    %v996 = vpop.f32.mrf.mxu0
    %v997 = vadd.f32 0.0, %v996
    %998 = vmatmul.f32.gmra.mxu0 %v870
    %v999 = vpop.f32.mrf.mxu0
    %v1000 = vadd.f32 0.0, %v999
    %1001 = vmatmul.f32.gmra.mxu0 %v873
    %v1002 = vpop.f32.mrf.mxu0
    %v1003 = vadd.f32 0.0, %v1002
    %1004 = vmatmul.f32.gmra.mxu0 %v876
    %v1005 = vpop.f32.mrf.mxu0
    %v1006 = vadd.f32 0.0, %v1005
    %1007 = vmatmul.f32.gmra.mxu0 %v879
    %v1008 = vpop.f32.mrf.mxu0
    %v1009 = vadd.f32 0.0, %v1008
    %1010 = vmatmul.f32.gmra.mxu0 %v882
    %v1011 = vpop.f32.mrf.mxu0
    %v1012 = vadd.f32 0.0, %v1011
    %1013 = vmatmul.f32.gmra.mxu0 %v885
    %v1014 = vpop.f32.mrf.mxu0
    %v1015 = vadd.f32 0.0, %v1014
    %1016 = vmatmul.f32.gmra.mxu0 %v888
    %v1017 = vpop.f32.mrf.mxu0
    %v1018 = vadd.f32 0.0, %v1017
    %1019 = vmatmul.f32.gmra.mxu0 %v891
    %v1020 = vpop.f32.mrf.mxu0
    %v1021 = vadd.f32 0.0, %v1020
    %1022 = vmatmul.f32.gmra.mxu0 %v894
    %v1023 = vpop.f32.mrf.mxu0
    %v1024 = vadd.f32 0.0, %v1023
    %1025 = vmatmul.f32.gmra.mxu0 %v897
    %v1026 = vpop.f32.mrf.mxu0
    %v1027 = vadd.f32 0.0, %v1026
    %1028 = vmatmul.f32.gmra.mxu0 %v900
    %v1029 = vpop.f32.mrf.mxu0
    %v1030 = vadd.f32 0.0, %v1029
    %1031 = vmatmul.f32.gmra.mxu0 %v903
    %v1032 = vpop.f32.mrf.mxu0
    %v1033 = vadd.f32 0.0, %v1032
    %1034 = vmatmul.f32.gmra.mxu0 %v906
    %v1035 = vpop.f32.mrf.mxu0
    %v1036 = vadd.f32 0.0, %v1035
    %1037 = vmatmul.f32.gmra.mxu0 %v909
    %v1038 = vpop.f32.mrf.mxu0
    %v1039 = vadd.f32 0.0, %v1038
    %1040 = vdwg.mxu0
    %v1041 = vadd.f32 %v810, %v929
    %v1042 = vadd.f32 %v811, %v994
    %v1043 = vadd.f32 %v812, %v932
    %v1044 = vadd.f32 %v813, %v997
    %v1045 = vadd.f32 %v814, %v935
    %v1046 = vadd.f32 %v815, %v1000
    %v1047 = vadd.f32 %v816, %v938
    %v1048 = vadd.f32 %v817, %v1003
    %v1049 = vadd.f32 %v818, %v941
    %v1050 = vadd.f32 %v819, %v1006
    %v1051 = vadd.f32 %v820, %v944
    %v1052 = vadd.f32 %v821, %v1009
    %v1053 = vadd.f32 %v822, %v947
    %v1054 = vadd.f32 %v823, %v1012
    %v1055 = vadd.f32 %v824, %v950
    %v1056 = vadd.f32 %v825, %v1015
    %v1057 = vadd.f32 %v826, %v953
    %v1058 = vadd.f32 %v827, %v1018
    %v1059 = vadd.f32 %v828, %v956
    %v1060 = vadd.f32 %v829, %v1021
    %v1061 = vadd.f32 %v830, %v959
    %v1062 = vadd.f32 %v831, %v1024
    %v1063 = vadd.f32 %v832, %v962
    %v1064 = vadd.f32 %v833, %v1027
    %v1065 = vadd.f32 %v834, %v965
    %v1066 = vadd.f32 %v835, %v1030
    %v1067 = vadd.f32 %v836, %v968
    %v1068 = vadd.f32 %v837, %v1033
    %v1069 = vadd.f32 %v838, %v971
    %v1070 = vadd.f32 %v839, %v1036
    %v1071 = vadd.f32 %v840, %v974
    %v1072 = vadd.f32 %v841, %v1039
    %v1073 = vld [vmem:[%s2] sm:$0x3]
    %v1075 = vperm.slane %v1073, 0
    %v1076 = vperm.slane %v1073, 1
    %v1079 = vadd.f32 %v1041, %v1075
    %v1080 = vadd.f32 %v1042, %v1076
    %v1081 = vadd.f32 %v1043, %v1075
    %v1082 = vadd.f32 %v1044, %v1076
    %v1083 = vadd.f32 %v1045, %v1075
    %v1084 = vadd.f32 %v1046, %v1076
    %v1085 = vadd.f32 %v1047, %v1075
    %v1086 = vadd.f32 %v1048, %v1076
    %v1087 = vadd.f32 %v1049, %v1075
    %v1088 = vadd.f32 %v1050, %v1076
    %v1089 = vadd.f32 %v1051, %v1075
    %v1090 = vadd.f32 %v1052, %v1076
    %v1091 = vadd.f32 %v1053, %v1075
    %v1092 = vadd.f32 %v1054, %v1076
    %v1093 = vadd.f32 %v1055, %v1075
    %v1094 = vadd.f32 %v1056, %v1076
    %v1095 = vadd.f32 %v1057, %v1075
    %v1096 = vadd.f32 %v1058, %v1076
    %v1097 = vadd.f32 %v1059, %v1075
    %v1098 = vadd.f32 %v1060, %v1076
    %v1099 = vadd.f32 %v1061, %v1075
    %v1100 = vadd.f32 %v1062, %v1076
    %v1101 = vadd.f32 %v1063, %v1075
    %v1102 = vadd.f32 %v1064, %v1076
    %v1103 = vadd.f32 %v1065, %v1075
    %v1104 = vadd.f32 %v1066, %v1076
    %v1105 = vadd.f32 %v1067, %v1075
    %v1106 = vadd.f32 %v1068, %v1076
    %v1107 = vadd.f32 %v1069, %v1075
    %v1108 = vadd.f32 %v1070, %v1076
    %v1109 = vadd.f32 %v1071, %v1075
    %v1110 = vadd.f32 %v1072, %v1076
    %v1111 = vmax.f32 %v1079, 0.0
    %v1112 = vmax.f32 %v1080, 0.0
    %v1113 = vmax.f32 %v1081, 0.0
    %v1114 = vmax.f32 %v1082, 0.0
    %v1115 = vmax.f32 %v1083, 0.0
    %v1116 = vmax.f32 %v1084, 0.0
    %v1117 = vmax.f32 %v1085, 0.0
    %v1118 = vmax.f32 %v1086, 0.0
    %v1119 = vmax.f32 %v1087, 0.0
    %v1120 = vmax.f32 %v1088, 0.0
    %v1121 = vmax.f32 %v1089, 0.0
    %v1122 = vmax.f32 %v1090, 0.0
    %v1123 = vmax.f32 %v1091, 0.0
    %v1124 = vmax.f32 %v1092, 0.0
    %v1125 = vmax.f32 %v1093, 0.0
    %v1126 = vmax.f32 %v1094, 0.0
    %v1127 = vmax.f32 %v1095, 0.0
    %v1128 = vmax.f32 %v1096, 0.0
    %v1129 = vmax.f32 %v1097, 0.0
    %v1130 = vmax.f32 %v1098, 0.0
    %v1131 = vmax.f32 %v1099, 0.0
    %v1132 = vmax.f32 %v1100, 0.0
    %v1133 = vmax.f32 %v1101, 0.0
    %v1134 = vmax.f32 %v1102, 0.0
    %v1135 = vmax.f32 %v1103, 0.0
    %v1136 = vmax.f32 %v1104, 0.0
    %v1137 = vmax.f32 %v1105, 0.0
    %v1138 = vmax.f32 %v1106, 0.0
    %v1139 = vmax.f32 %v1107, 0.0
    %v1140 = vmax.f32 %v1108, 0.0
    %v1141 = vmax.f32 %v1109, 0.0
    %v1142 = vmax.f32 %v1110, 0.0
    %v1143 = vmax.f32 %v1111, %v1112
    %v1144 = vmax.f32 %v1113, %v1114
    %v1145 = vmax.f32 %v1115, %v1116
    %v1146 = vmax.f32 %v1117, %v1118
    %v1147 = vmax.f32 %v1119, %v1120
    %v1148 = vmax.f32 %v1121, %v1122
    %v1149 = vmax.f32 %v1123, %v1124
    %v1150 = vmax.f32 %v1125, %v1126
    %v1151 = vmax.f32 %v1127, %v1128
    %v1152 = vmax.f32 %v1129, %v1130
    %v1153 = vmax.f32 %v1131, %v1132
    %v1154 = vmax.f32 %v1133, %v1134
    %v1155 = vmax.f32 %v1135, %v1136
    %v1156 = vmax.f32 %v1137, %v1138
    %v1157 = vmax.f32 %v1139, %v1140
    %v1158 = vmax.f32 %v1141, %v1142
    %v1159 = vmax.f32 %v1143, %v1144
    %v1160 = vmax.f32 %v1145, %v1146
    %v1161 = vmax.f32 %v1147, %v1148
    %v1162 = vmax.f32 %v1149, %v1150
    %v1163 = vmax.f32 %v1151, %v1152
    %v1164 = vmax.f32 %v1153, %v1154
    %v1165 = vmax.f32 %v1155, %v1156
    %v1166 = vmax.f32 %v1157, %v1158
    %v1167 = vld [vmem:[#allocation2] sm:$0xff]
    %v1168 = vld [vmem:[#allocation2 + $0x8] sm:$0xff]
    %v1169 = vld [vmem:[#allocation2 + $0x10] sm:$0xff]
    %v1170 = vld [vmem:[#allocation2 + $0x18] sm:$0xff]
    %v1171 = vld [vmem:[#allocation2 + $0x20] sm:$0xff]
    %v1172 = vld [vmem:[#allocation2 + $0x28] sm:$0xff]
    %v1173 = vld [vmem:[#allocation2 + $0x30] sm:$0xff]
    %v1174 = vld [vmem:[#allocation2 + $0x38] sm:$0xff]
    %v1175 = vld [vmem:[#allocation2 + $0x40] sm:$0xff]
    %v1176 = vld [vmem:[#allocation2 + $0x48] sm:$0xff]
    %v1177 = vld [vmem:[#allocation2 + $0x50] sm:$0xff]
    %v1178 = vld [vmem:[#allocation2 + $0x58] sm:$0xff]
    %v1179 = vld [vmem:[#allocation2 + $0x60] sm:$0xff]
    %v1180 = vld [vmem:[#allocation2 + $0x68] sm:$0xff]
    %v1181 = vld [vmem:[#allocation2 + $0x70] sm:$0xff]
    %v1182 = vld [vmem:[#allocation2 + $0x78] sm:$0xff]
    %v1183 = vld [vmem:[#allocation2 + $0x80] sm:$0xff]
    %v1184 = vld [vmem:[#allocation2 + $0x88] sm:$0xff]
    %v1185 = vld [vmem:[#allocation2 + $0x90] sm:$0xff]
    %v1186 = vld [vmem:[#allocation2 + $0x98] sm:$0xff]
    %v1187 = vld [vmem:[#allocation2 + $0xa0] sm:$0xff]
    %v1188 = vld [vmem:[#allocation2 + $0xa8] sm:$0xff]
    %v1189 = vld [vmem:[#allocation2 + $0xb0] sm:$0xff]
    %v1190 = vld [vmem:[#allocation2 + $0xb8] sm:$0xff]
    %v1191 = vld [vmem:[#allocation2 + $0xc0] sm:$0xff]
    %v1192 = vld [vmem:[#allocation2 + $0xc8] sm:$0xff]
    %v1193 = vld [vmem:[#allocation2 + $0xd0] sm:$0xff]
    %v1194 = vld [vmem:[#allocation2 + $0xd8] sm:$0xff]
    %v1195 = vld [vmem:[#allocation2 + $0xe0] sm:$0xff]
    %v1196 = vld [vmem:[#allocation2 + $0xe8] sm:$0xff]
    %v1197 = vld [vmem:[#allocation2 + $0xf0] sm:$0xff]
    %v1198 = vld [vmem:[#allocation2 + $0xf8] sm:$0xff]
    %s1199 = scalar_lea.vmem [#allocation2], 256
    %v1200 = vld [vmem:[%s1199] sm:$0xff]
    %v1201 = vld [vmem:[%s1199 + $0x8] sm:$0xff]
    %v1202 = vld [vmem:[%s1199 + $0x10] sm:$0xff]
    %v1203 = vld [vmem:[%s1199 + $0x18] sm:$0xff]
    %v1204 = vld [vmem:[%s1199 + $0x20] sm:$0xff]
    %v1205 = vld [vmem:[%s1199 + $0x28] sm:$0xff]
    %v1206 = vld [vmem:[%s1199 + $0x30] sm:$0xff]
    %v1207 = vld [vmem:[%s1199 + $0x38] sm:$0xff]
    %v1208 = vld [vmem:[%s1199 + $0x40] sm:$0xff]
    %v1209 = vld [vmem:[%s1199 + $0x48] sm:$0xff]
    %v1210 = vld [vmem:[%s1199 + $0x50] sm:$0xff]
    %v1211 = vld [vmem:[%s1199 + $0x58] sm:$0xff]
    %v1212 = vld [vmem:[%s1199 + $0x60] sm:$0xff]
    %v1213 = vld [vmem:[%s1199 + $0x68] sm:$0xff]
    %v1214 = vld [vmem:[%s1199 + $0x70] sm:$0xff]
    %v1215 = vld [vmem:[%s1199 + $0x78] sm:$0xff]
    %v1216 = vld [vmem:[%s1199 + $0x80] sm:$0xff]
    %v1217 = vld [vmem:[%s1199 + $0x88] sm:$0xff]
    %v1218 = vld [vmem:[%s1199 + $0x90] sm:$0xff]
    %v1219 = vld [vmem:[%s1199 + $0x98] sm:$0xff]
    %v1220 = vld [vmem:[%s1199 + $0xa0] sm:$0xff]
    %v1221 = vld [vmem:[%s1199 + $0xa8] sm:$0xff]
    %v1222 = vld [vmem:[%s1199 + $0xb0] sm:$0xff]
    %v1223 = vld [vmem:[%s1199 + $0xb8] sm:$0xff]
    %v1224 = vld [vmem:[%s1199 + $0xc0] sm:$0xff]
    %v1225 = vld [vmem:[%s1199 + $0xc8] sm:$0xff]
    %v1226 = vld [vmem:[%s1199 + $0xd0] sm:$0xff]
    %v1227 = vld [vmem:[%s1199 + $0xd8] sm:$0xff]
    %v1228 = vld [vmem:[%s1199 + $0xe0] sm:$0xff]
    %v1229 = vld [vmem:[%s1199 + $0xe8] sm:$0xff]
    %v1230 = vld [vmem:[%s1199 + $0xf0] sm:$0xff]
    %v1231 = vld [vmem:[%s1199 + $0xf8] sm:$0xff]
    %1232 = vmatpush.msra.mxu0 %v1230
    %1233 = vmatpush.msra.mxu0 %v1228
    %1234 = vmatpush.msra.mxu0 %v1226
    %1235 = vmatpush.msra.mxu0 %v1224
    %1236 = vmatpush.msra.mxu0 %v1222
    %1237 = vmatpush.msra.mxu0 %v1220
    %1238 = vmatpush.msra.mxu0 %v1218
    %1239 = vmatpush.msra.mxu0 %v1216
    %1240 = vmatpush.msra.mxu0 %v1214
    %1241 = vmatpush.msra.mxu0 %v1212
    %1242 = vmatpush.msra.mxu0 %v1210
    %1243 = vmatpush.msra.mxu0 %v1208
    %1244 = vmatpush.msra.mxu0 %v1206
    %1245 = vmatpush.msra.mxu0 %v1204
    %1246 = vmatpush.msra.mxu0 %v1202
    %1247 = vmatpush.msra.mxu0 %v1200
    %1248 = vmatmul.f32.gmra.mxu0 0.0
    %v1249 = vpop.f32.mrf.mxu0
    %v1250 = vadd.f32 0.0, %v1249
    %1251 = vmatmul.f32.gmra.mxu0 %v1159
    %v1252 = vpop.f32.mrf.mxu0
    %v1253 = vadd.f32 0.0, %v1252
    %1254 = vmatmul.f32.gmra.mxu0 %v1160
    %v1255 = vpop.f32.mrf.mxu0
    %v1256 = vadd.f32 0.0, %v1255
    %1257 = vmatmul.f32.gmra.mxu0 %v1161
    %v1258 = vpop.f32.mrf.mxu0
    %v1259 = vadd.f32 0.0, %v1258
    %1260 = vmatmul.f32.gmra.mxu0 %v1162
    %v1261 = vpop.f32.mrf.mxu0
    %v1262 = vadd.f32 0.0, %v1261
    %1263 = vmatmul.f32.gmra.mxu0 %v1163
    %v1264 = vpop.f32.mrf.mxu0
    %v1265 = vadd.f32 0.0, %v1264
    %1266 = vmatmul.f32.gmra.mxu0 %v1164
    %v1267 = vpop.f32.mrf.mxu0
    %v1268 = vadd.f32 0.0, %v1267
    %1269 = vmatmul.f32.gmra.mxu0 %v1165
    %v1270 = vpop.f32.mrf.mxu0
    %v1271 = vadd.f32 0.0, %v1270
    %1272 = vdwg.mxu0
    %1273 = vmatpush.msra.mxu0 %v1231
    %1274 = vmatpush.msra.mxu0 %v1229
    %1275 = vmatpush.msra.mxu0 %v1227
    %1276 = vmatpush.msra.mxu0 %v1225
    %1277 = vmatpush.msra.mxu0 %v1223
    %1278 = vmatpush.msra.mxu0 %v1221
    %1279 = vmatpush.msra.mxu0 %v1219
    %1280 = vmatpush.msra.mxu0 %v1217
    %1281 = vmatpush.msra.mxu0 %v1215
    %1282 = vmatpush.msra.mxu0 %v1213
    %1283 = vmatpush.msra.mxu0 %v1211
    %1284 = vmatpush.msra.mxu0 %v1209
    %1285 = vmatpush.msra.mxu0 %v1207
    %1286 = vmatpush.msra.mxu0 %v1205
    %1287 = vmatpush.msra.mxu0 %v1203
    %1288 = vmatpush.msra.mxu0 %v1201
    %1289 = vmatmul.f32.gmra.mxu0 0.0
    %v1290 = vpop.f32.mrf.mxu0
    %v1291 = vadd.f32 0.0, %v1290
    %1292 = vmatmul.f32.gmra.mxu0 %v1159
    %v1293 = vpop.f32.mrf.mxu0
    %v1294 = vadd.f32 0.0, %v1293
    %1295 = vmatmul.f32.gmra.mxu0 %v1160
    %v1296 = vpop.f32.mrf.mxu0
    %v1297 = vadd.f32 0.0, %v1296
    %1298 = vmatmul.f32.gmra.mxu0 %v1161
    %v1299 = vpop.f32.mrf.mxu0
    %v1300 = vadd.f32 0.0, %v1299
    %1301 = vmatmul.f32.gmra.mxu0 %v1162
    %v1302 = vpop.f32.mrf.mxu0
    %v1303 = vadd.f32 0.0, %v1302
    %1304 = vmatmul.f32.gmra.mxu0 %v1163
    %v1305 = vpop.f32.mrf.mxu0
    %v1306 = vadd.f32 0.0, %v1305
    %1307 = vmatmul.f32.gmra.mxu0 %v1164
    %v1308 = vpop.f32.mrf.mxu0
    %v1309 = vadd.f32 0.0, %v1308
    %1310 = vmatmul.f32.gmra.mxu0 %v1165
    %v1311 = vpop.f32.mrf.mxu0
    %v1312 = vadd.f32 0.0, %v1311
    %1313 = vdwg.mxu0
    %1314 = vmatpush.msra.mxu0 %v1197
    %1315 = vmatpush.msra.mxu0 %v1195
    %1316 = vmatpush.msra.mxu0 %v1193
    %1317 = vmatpush.msra.mxu0 %v1191
    %1318 = vmatpush.msra.mxu0 %v1189
    %1319 = vmatpush.msra.mxu0 %v1187
    %1320 = vmatpush.msra.mxu0 %v1185
    %1321 = vmatpush.msra.mxu0 %v1183
    %1322 = vmatpush.msra.mxu0 %v1181
    %1323 = vmatpush.msra.mxu0 %v1179
    %1324 = vmatpush.msra.mxu0 %v1177
    %1325 = vmatpush.msra.mxu0 %v1175
    %1326 = vmatpush.msra.mxu0 %v1173
    %1327 = vmatpush.msra.mxu0 %v1171
    %1328 = vmatpush.msra.mxu0 %v1169
    %1329 = vmatpush.msra.mxu0 %v1167
    %1330 = vmatmul.f32.gmra.mxu0 0.0
    %v1331 = vpop.f32.mrf.mxu0
    %v1332 = vadd.f32 %v1250, %v1331
    %1333 = vmatmul.f32.gmra.mxu0 0.0
    %v1334 = vpop.f32.mrf.mxu0
    %v1335 = vadd.f32 %v1253, %v1334
    %1336 = vmatmul.f32.gmra.mxu0 %v1159
    %v1337 = vpop.f32.mrf.mxu0
    %v1338 = vadd.f32 %v1256, %v1337
    %1339 = vmatmul.f32.gmra.mxu0 %v1160
    %v1340 = vpop.f32.mrf.mxu0
    %v1341 = vadd.f32 %v1259, %v1340
    %1342 = vmatmul.f32.gmra.mxu0 %v1161
    %v1343 = vpop.f32.mrf.mxu0
    %v1344 = vadd.f32 %v1262, %v1343
    %1345 = vmatmul.f32.gmra.mxu0 %v1162
    %v1346 = vpop.f32.mrf.mxu0
    %v1347 = vadd.f32 %v1265, %v1346
    %1348 = vmatmul.f32.gmra.mxu0 %v1163
    %v1349 = vpop.f32.mrf.mxu0
    %v1350 = vadd.f32 %v1268, %v1349
    %1351 = vmatmul.f32.gmra.mxu0 %v1164
    %v1352 = vpop.f32.mrf.mxu0
    %v1353 = vadd.f32 %v1271, %v1352
    %1354 = vdwg.mxu0
    %1355 = vmatpush.msra.mxu0 %v1198
    %1356 = vmatpush.msra.mxu0 %v1196
    %1357 = vmatpush.msra.mxu0 %v1194
    %1358 = vmatpush.msra.mxu0 %v1192
    %1359 = vmatpush.msra.mxu0 %v1190
    %1360 = vmatpush.msra.mxu0 %v1188
    %1361 = vmatpush.msra.mxu0 %v1186
    %1362 = vmatpush.msra.mxu0 %v1184
    %1363 = vmatpush.msra.mxu0 %v1182
    %1364 = vmatpush.msra.mxu0 %v1180
    %1365 = vmatpush.msra.mxu0 %v1178
    %1366 = vmatpush.msra.mxu0 %v1176
    %1367 = vmatpush.msra.mxu0 %v1174
    %1368 = vmatpush.msra.mxu0 %v1172
    %1369 = vmatpush.msra.mxu0 %v1170
    %1370 = vmatpush.msra.mxu0 %v1168
    %1371 = vmatmul.f32.gmra.mxu0 0.0
    %v1372 = vpop.f32.mrf.mxu0
    %v1373 = vadd.f32 %v1291, %v1372
    %1374 = vmatmul.f32.gmra.mxu0 0.0
    %v1375 = vpop.f32.mrf.mxu0
    %v1376 = vadd.f32 %v1294, %v1375
    %1377 = vmatmul.f32.gmra.mxu0 %v1159
    %v1378 = vpop.f32.mrf.mxu0
    %v1379 = vadd.f32 %v1297, %v1378
    %1380 = vmatmul.f32.gmra.mxu0 %v1160
    %v1381 = vpop.f32.mrf.mxu0
    %v1382 = vadd.f32 %v1300, %v1381
    %1383 = vmatmul.f32.gmra.mxu0 %v1161
    %v1384 = vpop.f32.mrf.mxu0
    %v1385 = vadd.f32 %v1303, %v1384
    %1386 = vmatmul.f32.gmra.mxu0 %v1162
    %v1387 = vpop.f32.mrf.mxu0
    %v1388 = vadd.f32 %v1306, %v1387
    %1389 = vmatmul.f32.gmra.mxu0 %v1163
    %v1390 = vpop.f32.mrf.mxu0
    %v1391 = vadd.f32 %v1309, %v1390
    %1392 = vmatmul.f32.gmra.mxu0 %v1164
    %v1393 = vpop.f32.mrf.mxu0
    %v1394 = vadd.f32 %v1312, %v1393
    %1395 = vdwg.mxu0
    %s1396 = scalar_lea.vmem [#allocation2], 512
    %v1397 = vld [vmem:[%s1396] sm:$0xff]
    %v1398 = vld [vmem:[%s1396 + $0x8] sm:$0xff]
    %v1399 = vld [vmem:[%s1396 + $0x10] sm:$0xff]
    %v1400 = vld [vmem:[%s1396 + $0x18] sm:$0xff]
    %v1401 = vld [vmem:[%s1396 + $0x20] sm:$0xff]
    %v1402 = vld [vmem:[%s1396 + $0x28] sm:$0xff]
    %v1403 = vld [vmem:[%s1396 + $0x30] sm:$0xff]
    %v1404 = vld [vmem:[%s1396 + $0x38] sm:$0xff]
    %v1405 = vld [vmem:[%s1396 + $0x40] sm:$0xff]
    %v1406 = vld [vmem:[%s1396 + $0x48] sm:$0xff]
    %v1407 = vld [vmem:[%s1396 + $0x50] sm:$0xff]
    %v1408 = vld [vmem:[%s1396 + $0x58] sm:$0xff]
    %v1409 = vld [vmem:[%s1396 + $0x60] sm:$0xff]
    %v1410 = vld [vmem:[%s1396 + $0x68] sm:$0xff]
    %v1411 = vld [vmem:[%s1396 + $0x70] sm:$0xff]
    %v1412 = vld [vmem:[%s1396 + $0x78] sm:$0xff]
    %v1413 = vld [vmem:[%s1396 + $0x80] sm:$0xff]
    %v1414 = vld [vmem:[%s1396 + $0x88] sm:$0xff]
    %v1415 = vld [vmem:[%s1396 + $0x90] sm:$0xff]
    %v1416 = vld [vmem:[%s1396 + $0x98] sm:$0xff]
    %v1417 = vld [vmem:[%s1396 + $0xa0] sm:$0xff]
    %v1418 = vld [vmem:[%s1396 + $0xa8] sm:$0xff]
    %v1419 = vld [vmem:[%s1396 + $0xb0] sm:$0xff]
    %v1420 = vld [vmem:[%s1396 + $0xb8] sm:$0xff]
    %v1421 = vld [vmem:[%s1396 + $0xc0] sm:$0xff]
    %v1422 = vld [vmem:[%s1396 + $0xc8] sm:$0xff]
    %v1423 = vld [vmem:[%s1396 + $0xd0] sm:$0xff]
    %v1424 = vld [vmem:[%s1396 + $0xd8] sm:$0xff]
    %v1425 = vld [vmem:[%s1396 + $0xe0] sm:$0xff]
    %v1426 = vld [vmem:[%s1396 + $0xe8] sm:$0xff]
    %v1427 = vld [vmem:[%s1396 + $0xf0] sm:$0xff]
    %v1428 = vld [vmem:[%s1396 + $0xf8] sm:$0xff]
    %1429 = vmatpush.msra.mxu0 %v1427
    %1430 = vmatpush.msra.mxu0 %v1425
    %1431 = vmatpush.msra.mxu0 %v1423
    %1432 = vmatpush.msra.mxu0 %v1421
    %1433 = vmatpush.msra.mxu0 %v1419
    %1434 = vmatpush.msra.mxu0 %v1417
    %1435 = vmatpush.msra.mxu0 %v1415
    %1436 = vmatpush.msra.mxu0 %v1413
    %1437 = vmatpush.msra.mxu0 %v1411
    %1438 = vmatpush.msra.mxu0 %v1409
    %1439 = vmatpush.msra.mxu0 %v1407
    %1440 = vmatpush.msra.mxu0 %v1405
    %1441 = vmatpush.msra.mxu0 %v1403
    %1442 = vmatpush.msra.mxu0 %v1401
    %1443 = vmatpush.msra.mxu0 %v1399
    %1444 = vmatpush.msra.mxu0 %v1397
    %1445 = vmatmul.f32.gmra.mxu0 %v1159
    %v1446 = vpop.f32.mrf.mxu0
    %v1447 = vadd.f32 0.0, %v1446
    %1448 = vmatmul.f32.gmra.mxu0 %v1160
    %v1449 = vpop.f32.mrf.mxu0
    %v1450 = vadd.f32 0.0, %v1449
    %1451 = vmatmul.f32.gmra.mxu0 %v1161
    %v1452 = vpop.f32.mrf.mxu0
    %v1453 = vadd.f32 0.0, %v1452
    %1454 = vmatmul.f32.gmra.mxu0 %v1162
    %v1455 = vpop.f32.mrf.mxu0
    %v1456 = vadd.f32 0.0, %v1455
    %1457 = vmatmul.f32.gmra.mxu0 %v1163
    %v1458 = vpop.f32.mrf.mxu0
    %v1459 = vadd.f32 0.0, %v1458
    %1460 = vmatmul.f32.gmra.mxu0 %v1164
    %v1461 = vpop.f32.mrf.mxu0
    %v1462 = vadd.f32 0.0, %v1461
    %1463 = vmatmul.f32.gmra.mxu0 %v1165
    %v1464 = vpop.f32.mrf.mxu0
    %v1465 = vadd.f32 0.0, %v1464
    %1466 = vmatmul.f32.gmra.mxu0 %v1166
    %v1467 = vpop.f32.mrf.mxu0
    %v1468 = vadd.f32 0.0, %v1467
    %1469 = vdwg.mxu0
    %1470 = vmatpush.msra.mxu0 %v1428
    %1471 = vmatpush.msra.mxu0 %v1426
    %1472 = vmatpush.msra.mxu0 %v1424
    %1473 = vmatpush.msra.mxu0 %v1422
    %1474 = vmatpush.msra.mxu0 %v1420
    %1475 = vmatpush.msra.mxu0 %v1418
    %1476 = vmatpush.msra.mxu0 %v1416
    %1477 = vmatpush.msra.mxu0 %v1414
    %1478 = vmatpush.msra.mxu0 %v1412
    %1479 = vmatpush.msra.mxu0 %v1410
    %1480 = vmatpush.msra.mxu0 %v1408
    %1481 = vmatpush.msra.mxu0 %v1406
    %1482 = vmatpush.msra.mxu0 %v1404
    %1483 = vmatpush.msra.mxu0 %v1402
    %1484 = vmatpush.msra.mxu0 %v1400
    %1485 = vmatpush.msra.mxu0 %v1398
    %1486 = vmatmul.f32.gmra.mxu0 %v1159
    %v1487 = vpop.f32.mrf.mxu0
    %v1488 = vadd.f32 0.0, %v1487
    %1489 = vmatmul.f32.gmra.mxu0 %v1160
    %v1490 = vpop.f32.mrf.mxu0
    %v1491 = vadd.f32 0.0, %v1490
    %1492 = vmatmul.f32.gmra.mxu0 %v1161
    %v1493 = vpop.f32.mrf.mxu0
    %v1494 = vadd.f32 0.0, %v1493
    %1495 = vmatmul.f32.gmra.mxu0 %v1162
    %v1496 = vpop.f32.mrf.mxu0
    %v1497 = vadd.f32 0.0, %v1496
    %1498 = vmatmul.f32.gmra.mxu0 %v1163
    %v1499 = vpop.f32.mrf.mxu0
    %v1500 = vadd.f32 0.0, %v1499
    %1501 = vmatmul.f32.gmra.mxu0 %v1164
    %v1502 = vpop.f32.mrf.mxu0
    %v1503 = vadd.f32 0.0, %v1502
    %1504 = vmatmul.f32.gmra.mxu0 %v1165
    %v1505 = vpop.f32.mrf.mxu0
    %v1506 = vadd.f32 0.0, %v1505
    %1507 = vmatmul.f32.gmra.mxu0 %v1166
    %v1508 = vpop.f32.mrf.mxu0
    %v1509 = vadd.f32 0.0, %v1508
    %1510 = vdwg.mxu0
    %v1511 = vadd.f32 %v1332, %v1447
    %v1512 = vadd.f32 %v1373, %v1488
    %v1513 = vadd.f32 %v1335, %v1450
    %v1514 = vadd.f32 %v1376, %v1491
    %v1515 = vadd.f32 %v1338, %v1453
    %v1516 = vadd.f32 %v1379, %v1494
    %v1517 = vadd.f32 %v1341, %v1456
    %v1518 = vadd.f32 %v1382, %v1497
    %v1519 = vadd.f32 %v1344, %v1459
    %v1520 = vadd.f32 %v1385, %v1500
    %v1521 = vadd.f32 %v1347, %v1462
    %v1522 = vadd.f32 %v1388, %v1503
    %v1523 = vadd.f32 %v1350, %v1465
    %v1524 = vadd.f32 %v1391, %v1506
    %v1525 = vadd.f32 %v1353, %v1468
    %v1526 = vadd.f32 %v1394, %v1509
    %s1527 = scalar_lea.vmem [#allocation2], 768
    %v1528 = vld [vmem:[%s1527] sm:$0xff]
    %v1529 = vld [vmem:[%s1527 + $0x8] sm:$0xff]
    %v1530 = vld [vmem:[%s1527 + $0x10] sm:$0xff]
    %v1531 = vld [vmem:[%s1527 + $0x18] sm:$0xff]
    %v1532 = vld [vmem:[%s1527 + $0x20] sm:$0xff]
    %v1533 = vld [vmem:[%s1527 + $0x28] sm:$0xff]
    %v1534 = vld [vmem:[%s1527 + $0x30] sm:$0xff]
    %v1535 = vld [vmem:[%s1527 + $0x38] sm:$0xff]
    %v1536 = vld [vmem:[%s1527 + $0x40] sm:$0xff]
    %v1537 = vld [vmem:[%s1527 + $0x48] sm:$0xff]
    %v1538 = vld [vmem:[%s1527 + $0x50] sm:$0xff]
    %v1539 = vld [vmem:[%s1527 + $0x58] sm:$0xff]
    %v1540 = vld [vmem:[%s1527 + $0x60] sm:$0xff]
    %v1541 = vld [vmem:[%s1527 + $0x68] sm:$0xff]
    %v1542 = vld [vmem:[%s1527 + $0x70] sm:$0xff]
    %v1543 = vld [vmem:[%s1527 + $0x78] sm:$0xff]
    %v1544 = vld [vmem:[%s1527 + $0x80] sm:$0xff]
    %v1545 = vld [vmem:[%s1527 + $0x88] sm:$0xff]
    %v1546 = vld [vmem:[%s1527 + $0x90] sm:$0xff]
    %v1547 = vld [vmem:[%s1527 + $0x98] sm:$0xff]
    %v1548 = vld [vmem:[%s1527 + $0xa0] sm:$0xff]
    %v1549 = vld [vmem:[%s1527 + $0xa8] sm:$0xff]
    %v1550 = vld [vmem:[%s1527 + $0xb0] sm:$0xff]
    %v1551 = vld [vmem:[%s1527 + $0xb8] sm:$0xff]
    %v1552 = vld [vmem:[%s1527 + $0xc0] sm:$0xff]
    %v1553 = vld [vmem:[%s1527 + $0xc8] sm:$0xff]
    %v1554 = vld [vmem:[%s1527 + $0xd0] sm:$0xff]
    %v1555 = vld [vmem:[%s1527 + $0xd8] sm:$0xff]
    %v1556 = vld [vmem:[%s1527 + $0xe0] sm:$0xff]
    %v1557 = vld [vmem:[%s1527 + $0xe8] sm:$0xff]
    %v1558 = vld [vmem:[%s1527 + $0xf0] sm:$0xff]
    %v1559 = vld [vmem:[%s1527 + $0xf8] sm:$0xff]
    %1560 = vmatpush.msra.mxu0 %v1558
    %1561 = vmatpush.msra.mxu0 %v1556
    %1562 = vmatpush.msra.mxu0 %v1554
    %1563 = vmatpush.msra.mxu0 %v1552
    %1564 = vmatpush.msra.mxu0 %v1550
    %1565 = vmatpush.msra.mxu0 %v1548
    %1566 = vmatpush.msra.mxu0 %v1546
    %1567 = vmatpush.msra.mxu0 %v1544
    %1568 = vmatpush.msra.mxu0 %v1542
    %1569 = vmatpush.msra.mxu0 %v1540
    %1570 = vmatpush.msra.mxu0 %v1538
    %1571 = vmatpush.msra.mxu0 %v1536
    %1572 = vmatpush.msra.mxu0 %v1534
    %1573 = vmatpush.msra.mxu0 %v1532
    %1574 = vmatpush.msra.mxu0 %v1530
    %1575 = vmatpush.msra.mxu0 %v1528
    %1576 = vmatmul.f32.gmra.mxu0 %v1160
    %v1577 = vpop.f32.mrf.mxu0
    %v1578 = vadd.f32 0.0, %v1577
    %1579 = vmatmul.f32.gmra.mxu0 %v1161
    %v1580 = vpop.f32.mrf.mxu0
    %v1581 = vadd.f32 0.0, %v1580
    %1582 = vmatmul.f32.gmra.mxu0 %v1162
    %v1583 = vpop.f32.mrf.mxu0
    %v1584 = vadd.f32 0.0, %v1583
    %1585 = vmatmul.f32.gmra.mxu0 %v1163
    %v1586 = vpop.f32.mrf.mxu0
    %v1587 = vadd.f32 0.0, %v1586
    %1588 = vmatmul.f32.gmra.mxu0 %v1164
    %v1589 = vpop.f32.mrf.mxu0
    %v1590 = vadd.f32 0.0, %v1589
    %1591 = vmatmul.f32.gmra.mxu0 %v1165
    %v1592 = vpop.f32.mrf.mxu0
    %v1593 = vadd.f32 0.0, %v1592
    %1594 = vmatmul.f32.gmra.mxu0 %v1166
    %v1595 = vpop.f32.mrf.mxu0
    %v1596 = vadd.f32 0.0, %v1595
    %1597 = vmatmul.f32.gmra.mxu0 0.0
    %v1598 = vpop.f32.mrf.mxu0
    %v1599 = vadd.f32 0.0, %v1598
    %1600 = vdwg.mxu0
    %1601 = vmatpush.msra.mxu0 %v1559
    %1602 = vmatpush.msra.mxu0 %v1557
    %1603 = vmatpush.msra.mxu0 %v1555
    %1604 = vmatpush.msra.mxu0 %v1553
    %1605 = vmatpush.msra.mxu0 %v1551
    %1606 = vmatpush.msra.mxu0 %v1549
    %1607 = vmatpush.msra.mxu0 %v1547
    %1608 = vmatpush.msra.mxu0 %v1545
    %1609 = vmatpush.msra.mxu0 %v1543
    %1610 = vmatpush.msra.mxu0 %v1541
    %1611 = vmatpush.msra.mxu0 %v1539
    %1612 = vmatpush.msra.mxu0 %v1537
    %1613 = vmatpush.msra.mxu0 %v1535
    %1614 = vmatpush.msra.mxu0 %v1533
    %1615 = vmatpush.msra.mxu0 %v1531
    %1616 = vmatpush.msra.mxu0 %v1529
    %1617 = vmatmul.f32.gmra.mxu0 %v1160
    %v1618 = vpop.f32.mrf.mxu0
    %v1619 = vadd.f32 0.0, %v1618
    %1620 = vmatmul.f32.gmra.mxu0 %v1161
    %v1621 = vpop.f32.mrf.mxu0
    %v1622 = vadd.f32 0.0, %v1621
    %1623 = vmatmul.f32.gmra.mxu0 %v1162
    %v1624 = vpop.f32.mrf.mxu0
    %v1625 = vadd.f32 0.0, %v1624
    %1626 = vmatmul.f32.gmra.mxu0 %v1163
    %v1627 = vpop.f32.mrf.mxu0
    %v1628 = vadd.f32 0.0, %v1627
    %1629 = vmatmul.f32.gmra.mxu0 %v1164
    %v1630 = vpop.f32.mrf.mxu0
    %v1631 = vadd.f32 0.0, %v1630
    %1632 = vmatmul.f32.gmra.mxu0 %v1165
    %v1633 = vpop.f32.mrf.mxu0
    %v1634 = vadd.f32 0.0, %v1633
    %1635 = vmatmul.f32.gmra.mxu0 %v1166
    %v1636 = vpop.f32.mrf.mxu0
    %v1637 = vadd.f32 0.0, %v1636
    %1638 = vmatmul.f32.gmra.mxu0 0.0
    %v1639 = vpop.f32.mrf.mxu0
    %v1640 = vadd.f32 0.0, %v1639
    %1641 = vdwg.mxu0
    %v1642 = vadd.f32 %v1511, %v1578
    %v1643 = vadd.f32 %v1512, %v1619
    %v1644 = vadd.f32 %v1513, %v1581
    %v1645 = vadd.f32 %v1514, %v1622
    %v1646 = vadd.f32 %v1515, %v1584
    %v1647 = vadd.f32 %v1516, %v1625
    %v1648 = vadd.f32 %v1517, %v1587
    %v1649 = vadd.f32 %v1518, %v1628
    %v1650 = vadd.f32 %v1519, %v1590
    %v1651 = vadd.f32 %v1520, %v1631
    %v1652 = vadd.f32 %v1521, %v1593
    %v1653 = vadd.f32 %v1522, %v1634
    %v1654 = vadd.f32 %v1523, %v1596
    %v1655 = vadd.f32 %v1524, %v1637
    %v1656 = vadd.f32 %v1525, %v1599
    %v1657 = vadd.f32 %v1526, %v1640
    %s1658 = scalar_lea.vmem [#allocation2], 1024
    %v1659 = vld [vmem:[%s1658] sm:$0xff]
    %v1660 = vld [vmem:[%s1658 + $0x8] sm:$0xff]
    %v1661 = vld [vmem:[%s1658 + $0x10] sm:$0xff]
    %v1662 = vld [vmem:[%s1658 + $0x18] sm:$0xff]
    %v1663 = vld [vmem:[%s1658 + $0x20] sm:$0xff]
    %v1664 = vld [vmem:[%s1658 + $0x28] sm:$0xff]
    %v1665 = vld [vmem:[%s1658 + $0x30] sm:$0xff]
    %v1666 = vld [vmem:[%s1658 + $0x38] sm:$0xff]
    %v1667 = vld [vmem:[%s1658 + $0x40] sm:$0xff]
    %v1668 = vld [vmem:[%s1658 + $0x48] sm:$0xff]
    %v1669 = vld [vmem:[%s1658 + $0x50] sm:$0xff]
    %v1670 = vld [vmem:[%s1658 + $0x58] sm:$0xff]
    %v1671 = vld [vmem:[%s1658 + $0x60] sm:$0xff]
    %v1672 = vld [vmem:[%s1658 + $0x68] sm:$0xff]
    %v1673 = vld [vmem:[%s1658 + $0x70] sm:$0xff]
    %v1674 = vld [vmem:[%s1658 + $0x78] sm:$0xff]
    %v1675 = vld [vmem:[%s1658 + $0x80] sm:$0xff]
    %v1676 = vld [vmem:[%s1658 + $0x88] sm:$0xff]
    %v1677 = vld [vmem:[%s1658 + $0x90] sm:$0xff]
    %v1678 = vld [vmem:[%s1658 + $0x98] sm:$0xff]
    %v1679 = vld [vmem:[%s1658 + $0xa0] sm:$0xff]
    %v1680 = vld [vmem:[%s1658 + $0xa8] sm:$0xff]
    %v1681 = vld [vmem:[%s1658 + $0xb0] sm:$0xff]
    %v1682 = vld [vmem:[%s1658 + $0xb8] sm:$0xff]
    %v1683 = vld [vmem:[%s1658 + $0xc0] sm:$0xff]
    %v1684 = vld [vmem:[%s1658 + $0xc8] sm:$0xff]
    %v1685 = vld [vmem:[%s1658 + $0xd0] sm:$0xff]
    %v1686 = vld [vmem:[%s1658 + $0xd8] sm:$0xff]
    %v1687 = vld [vmem:[%s1658 + $0xe0] sm:$0xff]
    %v1688 = vld [vmem:[%s1658 + $0xe8] sm:$0xff]
    %v1689 = vld [vmem:[%s1658 + $0xf0] sm:$0xff]
    %v1690 = vld [vmem:[%s1658 + $0xf8] sm:$0xff]
    %1691 = vmatpush.msra.mxu0 %v1689
    %1692 = vmatpush.msra.mxu0 %v1687
    %1693 = vmatpush.msra.mxu0 %v1685
    %1694 = vmatpush.msra.mxu0 %v1683
    %1695 = vmatpush.msra.mxu0 %v1681
    %1696 = vmatpush.msra.mxu0 %v1679
    %1697 = vmatpush.msra.mxu0 %v1677
    %1698 = vmatpush.msra.mxu0 %v1675
    %1699 = vmatpush.msra.mxu0 %v1673
    %1700 = vmatpush.msra.mxu0 %v1671
    %1701 = vmatpush.msra.mxu0 %v1669
    %1702 = vmatpush.msra.mxu0 %v1667
    %1703 = vmatpush.msra.mxu0 %v1665
    %1704 = vmatpush.msra.mxu0 %v1663
    %1705 = vmatpush.msra.mxu0 %v1661
    %1706 = vmatpush.msra.mxu0 %v1659
    %1707 = vmatmul.f32.gmra.mxu0 %v1161
    %v1708 = vpop.f32.mrf.mxu0
    %v1709 = vadd.f32 0.0, %v1708
    %1710 = vmatmul.f32.gmra.mxu0 %v1162
    %v1711 = vpop.f32.mrf.mxu0
    %v1712 = vadd.f32 0.0, %v1711
    %1713 = vmatmul.f32.gmra.mxu0 %v1163
    %v1714 = vpop.f32.mrf.mxu0
    %v1715 = vadd.f32 0.0, %v1714
    %1716 = vmatmul.f32.gmra.mxu0 %v1164
    %v1717 = vpop.f32.mrf.mxu0
    %v1718 = vadd.f32 0.0, %v1717
    %1719 = vmatmul.f32.gmra.mxu0 %v1165
    %v1720 = vpop.f32.mrf.mxu0
    %v1721 = vadd.f32 0.0, %v1720
    %1722 = vmatmul.f32.gmra.mxu0 %v1166
    %v1723 = vpop.f32.mrf.mxu0
    %v1724 = vadd.f32 0.0, %v1723
    %1725 = vmatmul.f32.gmra.mxu0 0.0
    %v1726 = vpop.f32.mrf.mxu0
    %v1727 = vadd.f32 0.0, %v1726
    %1728 = vmatmul.f32.gmra.mxu0 0.0
    %v1729 = vpop.f32.mrf.mxu0
    %v1730 = vadd.f32 0.0, %v1729
    %1731 = vdwg.mxu0
    %1732 = vmatpush.msra.mxu0 %v1690
    %1733 = vmatpush.msra.mxu0 %v1688
    %1734 = vmatpush.msra.mxu0 %v1686
    %1735 = vmatpush.msra.mxu0 %v1684
    %1736 = vmatpush.msra.mxu0 %v1682
    %1737 = vmatpush.msra.mxu0 %v1680
    %1738 = vmatpush.msra.mxu0 %v1678
    %1739 = vmatpush.msra.mxu0 %v1676
    %1740 = vmatpush.msra.mxu0 %v1674
    %1741 = vmatpush.msra.mxu0 %v1672
    %1742 = vmatpush.msra.mxu0 %v1670
    %1743 = vmatpush.msra.mxu0 %v1668
    %1744 = vmatpush.msra.mxu0 %v1666
    %1745 = vmatpush.msra.mxu0 %v1664
    %1746 = vmatpush.msra.mxu0 %v1662
    %1747 = vmatpush.msra.mxu0 %v1660
    %1748 = vmatmul.f32.gmra.mxu0 %v1161
    %v1749 = vpop.f32.mrf.mxu0
    %v1750 = vadd.f32 0.0, %v1749
    %1751 = vmatmul.f32.gmra.mxu0 %v1162
    %v1752 = vpop.f32.mrf.mxu0
    %v1753 = vadd.f32 0.0, %v1752
    %1754 = vmatmul.f32.gmra.mxu0 %v1163
    %v1755 = vpop.f32.mrf.mxu0
    %v1756 = vadd.f32 0.0, %v1755
    %1757 = vmatmul.f32.gmra.mxu0 %v1164
    %v1758 = vpop.f32.mrf.mxu0
    %v1759 = vadd.f32 0.0, %v1758
    %1760 = vmatmul.f32.gmra.mxu0 %v1165
    %v1761 = vpop.f32.mrf.mxu0
    %v1762 = vadd.f32 0.0, %v1761
    %1763 = vmatmul.f32.gmra.mxu0 %v1166
    %v1764 = vpop.f32.mrf.mxu0
    %v1765 = vadd.f32 0.0, %v1764
    %1766 = vmatmul.f32.gmra.mxu0 0.0
    %v1767 = vpop.f32.mrf.mxu0
    %v1768 = vadd.f32 0.0, %v1767
    %1769 = vmatmul.f32.gmra.mxu0 0.0
    %v1770 = vpop.f32.mrf.mxu0
    %v1771 = vadd.f32 0.0, %v1770
    %1772 = vdwg.mxu0
    %v1773 = vadd.f32 %v1642, %v1709
    %v1774 = vadd.f32 %v1643, %v1750
    %v1775 = vadd.f32 %v1644, %v1712
    %v1776 = vadd.f32 %v1645, %v1753
    %v1777 = vadd.f32 %v1646, %v1715
    %v1778 = vadd.f32 %v1647, %v1756
    %v1779 = vadd.f32 %v1648, %v1718
    %v1780 = vadd.f32 %v1649, %v1759
    %v1781 = vadd.f32 %v1650, %v1721
    %v1782 = vadd.f32 %v1651, %v1762
    %v1783 = vadd.f32 %v1652, %v1724
    %v1784 = vadd.f32 %v1653, %v1765
    %v1785 = vadd.f32 %v1654, %v1727
    %v1786 = vadd.f32 %v1655, %v1768
    %v1787 = vadd.f32 %v1656, %v1730
    %v1788 = vadd.f32 %v1657, %v1771
    %v1789 = vld [vmem:[%s4] sm:$0x3]
    %v1791 = vperm.slane %v1789, 0
    %v1792 = vperm.slane %v1789, 1
    %v1795 = vadd.f32 %v1773, %v1791
    %v1796 = vadd.f32 %v1774, %v1792
    %v1797 = vadd.f32 %v1775, %v1791
    %v1798 = vadd.f32 %v1776, %v1792
    %v1799 = vadd.f32 %v1777, %v1791
    %v1800 = vadd.f32 %v1778, %v1792
    %v1801 = vadd.f32 %v1779, %v1791
    %v1802 = vadd.f32 %v1780, %v1792
    %v1803 = vadd.f32 %v1781, %v1791
    %v1804 = vadd.f32 %v1782, %v1792
    %v1805 = vadd.f32 %v1783, %v1791
    %v1806 = vadd.f32 %v1784, %v1792
    %v1807 = vadd.f32 %v1785, %v1791
    %v1808 = vadd.f32 %v1786, %v1792
    %v1809 = vadd.f32 %v1787, %v1791
    %v1810 = vadd.f32 %v1788, %v1792
    %v1811 = vmax.f32 %v1795, 0.0
    %v1812 = vmax.f32 %v1796, 0.0
    %v1813 = vmax.f32 %v1797, 0.0
    %v1814 = vmax.f32 %v1798, 0.0
    %v1815 = vmax.f32 %v1799, 0.0
    %v1816 = vmax.f32 %v1800, 0.0
    %v1817 = vmax.f32 %v1801, 0.0
    %v1818 = vmax.f32 %v1802, 0.0
    %v1819 = vmax.f32 %v1803, 0.0
    %v1820 = vmax.f32 %v1804, 0.0
    %v1821 = vmax.f32 %v1805, 0.0
    %v1822 = vmax.f32 %v1806, 0.0
    %v1823 = vmax.f32 %v1807, 0.0
    %v1824 = vmax.f32 %v1808, 0.0
    %v1825 = vmax.f32 %v1809, 0.0
    %v1826 = vmax.f32 %v1810, 0.0
    %v1827 = vmax.f32 %v1811, %v1812
    %v1828 = vmax.f32 %v1813, %v1814
    %v1829 = vmax.f32 %v1815, %v1816
    %v1830 = vmax.f32 %v1817, %v1818
    %v1831 = vmax.f32 %v1819, %v1820
    %v1832 = vmax.f32 %v1821, %v1822
    %v1833 = vmax.f32 %v1823, %v1824
    %v1834 = vmax.f32 %v1825, %v1826
    %v1835 = vmax.f32 %v1827, %v1828
    %v1836 = vmax.f32 %v1829, %v1830
    %v1837 = vmax.f32 %v1831, %v1832
    %v1838 = vmax.f32 %v1833, %v1834
    %v1839 = vld [vmem:[%s5] sm:$0xff]
    %v1840 = vld [vmem:[%s5 + $0x8] sm:$0xff]
    %v1841 = vld [vmem:[%s5 + $0x10] sm:$0xff]
    %v1842 = vld [vmem:[%s5 + $0x18] sm:$0xff]
    %v1843 = vld [vmem:[%s5 + $0x20] sm:$0xff]
    %v1844 = vld [vmem:[%s5 + $0x28] sm:$0xff]
    %v1845 = vld [vmem:[%s5 + $0x30] sm:$0xff]
    %v1846 = vld [vmem:[%s5 + $0x38] sm:$0xff]
    %v1847 = vld [vmem:[%s5 + $0x40] sm:$0xff]
    %v1848 = vld [vmem:[%s5 + $0x48] sm:$0xff]
    %v1849 = vld [vmem:[%s5 + $0x50] sm:$0xff]
    %v1850 = vld [vmem:[%s5 + $0x58] sm:$0xff]
    %v1851 = vld [vmem:[%s5 + $0x60] sm:$0xff]
    %v1852 = vld [vmem:[%s5 + $0x68] sm:$0xff]
    %v1853 = vld [vmem:[%s5 + $0x70] sm:$0xff]
    %v1854 = vld [vmem:[%s5 + $0x78] sm:$0xff]
    %s1855 = scalar_lea.vmem %s5, 128
    %v1856 = vld [vmem:[%s1855] sm:$0xff]
    %v1857 = vld [vmem:[%s1855 + $0x8] sm:$0xff]
    %v1858 = vld [vmem:[%s1855 + $0x10] sm:$0xff]
    %v1859 = vld [vmem:[%s1855 + $0x18] sm:$0xff]
    %v1860 = vld [vmem:[%s1855 + $0x20] sm:$0xff]
    %v1861 = vld [vmem:[%s1855 + $0x28] sm:$0xff]
    %v1862 = vld [vmem:[%s1855 + $0x30] sm:$0xff]
    %v1863 = vld [vmem:[%s1855 + $0x38] sm:$0xff]
    %v1864 = vld [vmem:[%s1855 + $0x40] sm:$0xff]
    %v1865 = vld [vmem:[%s1855 + $0x48] sm:$0xff]
    %v1866 = vld [vmem:[%s1855 + $0x50] sm:$0xff]
    %v1867 = vld [vmem:[%s1855 + $0x58] sm:$0xff]
    %v1868 = vld [vmem:[%s1855 + $0x60] sm:$0xff]
    %v1869 = vld [vmem:[%s1855 + $0x68] sm:$0xff]
    %v1870 = vld [vmem:[%s1855 + $0x70] sm:$0xff]
    %v1871 = vld [vmem:[%s1855 + $0x78] sm:$0xff]
    %1872 = vmatpush.msra.mxu0 %v1871
    %1873 = vmatpush.msra.mxu0 %v1870
    %1874 = vmatpush.msra.mxu0 %v1869
    %1875 = vmatpush.msra.mxu0 %v1868
    %1876 = vmatpush.msra.mxu0 %v1867
    %1877 = vmatpush.msra.mxu0 %v1866
    %1878 = vmatpush.msra.mxu0 %v1865
    %1879 = vmatpush.msra.mxu0 %v1864
    %1880 = vmatpush.msra.mxu0 %v1863
    %1881 = vmatpush.msra.mxu0 %v1862
    %1882 = vmatpush.msra.mxu0 %v1861
    %1883 = vmatpush.msra.mxu0 %v1860
    %1884 = vmatpush.msra.mxu0 %v1859
    %1885 = vmatpush.msra.mxu0 %v1858
    %1886 = vmatpush.msra.mxu0 %v1857
    %1887 = vmatpush.msra.mxu0 %v1856
    %1888 = vmatmul.f32.gmra.mxu0 %v1836
    %v1889 = vpop.f32.mrf.mxu0
    %v1890 = vadd.f32 0.0, %v1889
    %1891 = vdwg.mxu0
    %1892 = vmatpush.msra.mxu0 %v1854
    %1893 = vmatpush.msra.mxu0 %v1853
    %1894 = vmatpush.msra.mxu0 %v1852
    %1895 = vmatpush.msra.mxu0 %v1851
    %1896 = vmatpush.msra.mxu0 %v1850
    %1897 = vmatpush.msra.mxu0 %v1849
    %1898 = vmatpush.msra.mxu0 %v1848
    %1899 = vmatpush.msra.mxu0 %v1847
    %1900 = vmatpush.msra.mxu0 %v1846
    %1901 = vmatpush.msra.mxu0 %v1845
    %1902 = vmatpush.msra.mxu0 %v1844
    %1903 = vmatpush.msra.mxu0 %v1843
    %1904 = vmatpush.msra.mxu0 %v1842
    %1905 = vmatpush.msra.mxu0 %v1841
    %1906 = vmatpush.msra.mxu0 %v1840
    %1907 = vmatpush.msra.mxu0 %v1839
    %1908 = vmatmul.f32.gmra.mxu0 %v1835
    %v1909 = vpop.f32.mrf.mxu0
    %v1910 = vadd.f32 %v1890, %v1909
    %1911 = vdwg.mxu0
    %s1912 = scalar_lea.vmem %s5, 256
    %v1913 = vld [vmem:[%s1912] sm:$0xff]
    %v1914 = vld [vmem:[%s1912 + $0x8] sm:$0xff]
    %v1915 = vld [vmem:[%s1912 + $0x10] sm:$0xff]
    %v1916 = vld [vmem:[%s1912 + $0x18] sm:$0xff]
    %v1917 = vld [vmem:[%s1912 + $0x20] sm:$0xff]
    %v1918 = vld [vmem:[%s1912 + $0x28] sm:$0xff]
    %v1919 = vld [vmem:[%s1912 + $0x30] sm:$0xff]
    %v1920 = vld [vmem:[%s1912 + $0x38] sm:$0xff]
    %v1921 = vld [vmem:[%s1912 + $0x40] sm:$0xff]
    %v1922 = vld [vmem:[%s1912 + $0x48] sm:$0xff]
    %v1923 = vld [vmem:[%s1912 + $0x50] sm:$0xff]
    %v1924 = vld [vmem:[%s1912 + $0x58] sm:$0xff]
    %v1925 = vld [vmem:[%s1912 + $0x60] sm:$0xff]
    %v1926 = vld [vmem:[%s1912 + $0x68] sm:$0xff]
    %v1927 = vld [vmem:[%s1912 + $0x70] sm:$0xff]
    %v1928 = vld [vmem:[%s1912 + $0x78] sm:$0xff]
    %1929 = vmatpush.msra.mxu0 %v1928
    %1930 = vmatpush.msra.mxu0 %v1927
    %1931 = vmatpush.msra.mxu0 %v1926
    %1932 = vmatpush.msra.mxu0 %v1925
    %1933 = vmatpush.msra.mxu0 %v1924
    %1934 = vmatpush.msra.mxu0 %v1923
    %1935 = vmatpush.msra.mxu0 %v1922
    %1936 = vmatpush.msra.mxu0 %v1921
    %1937 = vmatpush.msra.mxu0 %v1920
    %1938 = vmatpush.msra.mxu0 %v1919
    %1939 = vmatpush.msra.mxu0 %v1918
    %1940 = vmatpush.msra.mxu0 %v1917
    %1941 = vmatpush.msra.mxu0 %v1916
    %1942 = vmatpush.msra.mxu0 %v1915
    %1943 = vmatpush.msra.mxu0 %v1914
    %1944 = vmatpush.msra.mxu0 %v1913
    %1945 = vmatmul.f32.gmra.mxu0 %v1837
    %v1946 = vpop.f32.mrf.mxu0
    %v1947 = vadd.f32 0.0, %v1946
    %1948 = vdwg.mxu0
    %v1949 = vadd.f32 %v1910, %v1947
    %s1950 = scalar_lea.vmem %s5, 384
    %v1951 = vld [vmem:[%s1950] sm:$0xff]
    %v1952 = vld [vmem:[%s1950 + $0x8] sm:$0xff]
    %v1953 = vld [vmem:[%s1950 + $0x10] sm:$0xff]
    %v1954 = vld [vmem:[%s1950 + $0x18] sm:$0xff]
    %v1955 = vld [vmem:[%s1950 + $0x20] sm:$0xff]
    %v1956 = vld [vmem:[%s1950 + $0x28] sm:$0xff]
    %v1957 = vld [vmem:[%s1950 + $0x30] sm:$0xff]
    %v1958 = vld [vmem:[%s1950 + $0x38] sm:$0xff]
    %v1959 = vld [vmem:[%s1950 + $0x40] sm:$0xff]
    %v1960 = vld [vmem:[%s1950 + $0x48] sm:$0xff]
    %v1961 = vld [vmem:[%s1950 + $0x50] sm:$0xff]
    %v1962 = vld [vmem:[%s1950 + $0x58] sm:$0xff]
    %v1963 = vld [vmem:[%s1950 + $0x60] sm:$0xff]
    %v1964 = vld [vmem:[%s1950 + $0x68] sm:$0xff]
    %v1965 = vld [vmem:[%s1950 + $0x70] sm:$0xff]
    %v1966 = vld [vmem:[%s1950 + $0x78] sm:$0xff]
    %1967 = vmatpush.msra.mxu0 %v1966
    %1968 = vmatpush.msra.mxu0 %v1965
    %1969 = vmatpush.msra.mxu0 %v1964
    %1970 = vmatpush.msra.mxu0 %v1963
    %1971 = vmatpush.msra.mxu0 %v1962
    %1972 = vmatpush.msra.mxu0 %v1961
    %1973 = vmatpush.msra.mxu0 %v1960
    %1974 = vmatpush.msra.mxu0 %v1959
    %1975 = vmatpush.msra.mxu0 %v1958
    %1976 = vmatpush.msra.mxu0 %v1957
    %1977 = vmatpush.msra.mxu0 %v1956
    %1978 = vmatpush.msra.mxu0 %v1955
    %1979 = vmatpush.msra.mxu0 %v1954
    %1980 = vmatpush.msra.mxu0 %v1953
    %1981 = vmatpush.msra.mxu0 %v1952
    %1982 = vmatpush.msra.mxu0 %v1951
    %1983 = vmatmul.f32.gmra.mxu0 %v1838
    %v1984 = vpop.f32.mrf.mxu0
    %v1985 = vadd.f32 0.0, %v1984
    %1986 = vdwg.mxu0
    %v1987 = vadd.f32 %v1949, %v1985
    %v1988 = vld [vmem:[%s6] sm:$0x1]
    %v1990 = vperm.slane %v1988, 0
    %v1992 = vadd.f32 %v1987, %v1990
    %1993 = vst [vmem:[%s7] sm:$0xff] %v1992
    // Predicated region
    $region34: #{cnn_forward.1} parent=1 // pred_check
      _
    $region35: #{cnn_forward.1} parent=1 // pred_check_branch
      %1995 = sbr.rel (0) target = $region37
    $region36: #{cnn_forward.1} parent=1 // pred_region
      _
    $region37: #{cnn_forward.1} parent=1 // pred_fallthru
      _
    // Predicated region
    $region38: #{cnn_forward.1} parent=1 // pred_check
      _
    $region39: #{cnn_forward.1} parent=1 // pred_check_branch
      %1997 = sbr.rel (0) target = $region41
    $region40: #{cnn_forward.1} parent=1 // pred_region
      _
    $region41: #{cnn_forward.1} parent=1 // pred_fallthru
      _
    %1998 = vsyncpa [#allocation3], 1

</llo_original>
